<compile_context>
chip_gen: v5e
topology: v5e:2x2
jax: 0.10.0
libtpu: 0.0.40
codegen_flags: <defaults>
</compile_context>

<pallas_src>
import jax
import jax.numpy as jnp
from jax import lax
from jax.experimental import pallas as pl
from jax.experimental.pallas import tpu as pltpu

BN_EPS = 1e-5
LANE = 128
TM_MAX = 512                      # max rows (N*Ho*Wo) per tile
TK_MAX = 512                      # max reduction elements per tile
VMEM_LIMIT = 32 * 1024 * 1024     # explicit, generation-safe (<= v7x scoped budget)


def _round_up(x, m):
    return ((x + m - 1) // m) * m


def _pad_dim(d, dmax, align):
    """Padded extent for a dimension: minimal (align) padding if a single full-extent
    tile fits, otherwise pad to a multiple of the max tile size."""
    if d <= dmax:
        return _round_up(d, align)
    return _round_up(d, dmax)


def _tile_of(dp, dmax):
    return dp if dp <= dmax else dmax


# ----------------------------- Pallas kernels -----------------------------

def _make_conv_kernel(fuse_input_bnrelu, m_real, tm):
    """Tiled matmul (im2col conv) with fused per-tile BN statistics.

    If `fuse_input_bnrelu`, the previous block's BatchNorm + ReLU is applied to the
    patch tile before it hits the MXU:  p <- relu(p * k_scale + k_shift), with rows
    >= m_real (zero-padded patch rows) masked back to zero so the batch statistics
    computed from the accumulator stay exact.
    """

    def body(p_ref, w_ref, o_ref, s_ref, acc_ref, ksc_ref=None, ksh_ref=None):
        k = pl.program_id(2)

        @pl.when(k == 0)
        def _():
            acc_ref[...] = jnp.zeros_like(acc_ref)

        p = p_ref[...]
        if fuse_input_bnrelu:
            p32 = jnp.maximum(
                p.astype(jnp.float32) * ksc_ref[...] + ksh_ref[...], 0.0)
            row = pl.program_id(0) * tm + lax.broadcasted_iota(jnp.int32, (tm, 1), 0)
            p32 = jnp.where(row < m_real, p32, 0.0)   # keep padded rows exactly zero
            p = p32.astype(jnp.bfloat16)

        acc_ref[...] += jnp.dot(p, w_ref[...], preferred_element_type=jnp.float32)

        @pl.when(k == pl.num_programs(2) - 1)
        def _():
            acc = acc_ref[...]
            o_ref[...] = acc.astype(o_ref.dtype)                  # bf16 writeback
            ssum = jnp.sum(acc, axis=0, keepdims=True)            # (1, TN)
            ssq = jnp.sum(acc * acc, axis=0, keepdims=True)       # (1, TN)
            s_ref[...] = jnp.concatenate([ssum, ssq], axis=0)[None]

    if fuse_input_bnrelu:
        def kernel(p_ref, w_ref, ksc_ref, ksh_ref, o_ref, s_ref, acc_ref):
            body(p_ref, w_ref, o_ref, s_ref, acc_ref, ksc_ref, ksh_ref)
    else:
        def kernel(p_ref, w_ref, o_ref, s_ref, acc_ref):
            body(p_ref, w_ref, o_ref, s_ref, acc_ref)
    return kernel


def _bn_relu_kernel(x_ref, sc_ref, sh_ref, o_ref):
    """y = max(x * scale + shift, 0) per (TM, TN) tile (bf16 in, f32 out)."""
    o_ref[...] = jnp.maximum(
        x_ref[...].astype(jnp.float32) * sc_ref[...] + sh_ref[...], 0.0)


# ------------------------------- JAX glue ----------------------------------

def _conv_matmul_with_stats(patches_p, wmat_p, m_real, k_scale=None, k_shift=None):
    """patches_p: (Mp, Kp) bf16, wmat_p: (Kp, Np) bf16 ->
       (Mp, Np) bf16 conv output, (mt, 2, Np) f32 partial (sum, sum_sq) stats.
       Optional k_scale/k_shift (1, Kp) f32 fuse the previous block's BN+ReLU."""
    Mp, Kp = patches_p.shape
    Np = wmat_p.shape[1]
    tm = _tile_of(Mp, TM_MAX)
    tk = _tile_of(Kp, TK_MAX)
    tn = 256 if Np % 256 == 0 else 128          # 256-wide N fills v6e/v7x MXU
    assert Mp % tm == 0 and Kp % tk == 0 and Np % tn == 0
    mt, nt, kt = Mp // tm, Np // tn, Kp // tk

    fused = k_scale is not None
    kernel = _make_conv_kernel(fused, m_real, tm)

    in_specs = [
        pl.BlockSpec((tm, tk), lambda m, n, k: (m, k)),
        pl.BlockSpec((tk, tn), lambda m, n, k: (k, n)),
    ]
    operands = [patches_p, wmat_p]
    if fused:
        in_specs += [
            pl.BlockSpec((1, tk), lambda m, n, k: (0, k)),
            pl.BlockSpec((1, tk), lambda m, n, k: (0, k)),
        ]
        operands += [k_scale, k_shift]

    return pl.pallas_call(
        kernel,
        out_shape=(
            jax.ShapeDtypeStruct((Mp, Np), jnp.bfloat16),
            jax.ShapeDtypeStruct((mt, 2, Np), jnp.float32),
        ),
        grid_spec=pltpu.PrefetchScalarGridSpec(
            num_scalar_prefetch=0,
            grid=(mt, nt, kt),
            in_specs=in_specs,
            out_specs=(
                pl.BlockSpec((tm, tn), lambda m, n, k: (m, n)),
                pl.BlockSpec((1, 2, tn), lambda m, n, k: (m, 0, n)),
            ),
            scratch_shapes=[pltpu.VMEM((tm, tn), jnp.float32)],
        ),
        compiler_params=pltpu.CompilerParams(
            dimension_semantics=("parallel", "parallel", "arbitrary"),
            vmem_limit_bytes=VMEM_LIMIT),
        cost_estimate=pl.CostEstimate(
            flops=2 * Mp * Kp * Np,
            transcendentals=0,
            bytes_accessed=Mp * Kp * 2 + Kp * Np * 2 + Mp * Np * 2),
    )(*operands)


def _bn_relu_apply(x, scale, shift):
    """x: (Mp, Np) bf16; scale/shift: (1, Np) f32 -> (Mp, Np) f32."""
    Mp, Np = x.shape
    tm = _tile_of(Mp, TM_MAX)
    tn = 256 if Np % 256 == 0 else 128
    mt, nt = Mp // tm, Np // tn
    return pl.pallas_call(
        _bn_relu_kernel,
        out_shape=jax.ShapeDtypeStruct((Mp, Np), jnp.float32),
        grid_spec=pltpu.PrefetchScalarGridSpec(
            num_scalar_prefetch=0,
            grid=(mt, nt),
            in_specs=[
                pl.BlockSpec((tm, tn), lambda m, n: (m, n)),
                pl.BlockSpec((1, tn), lambda m, n: (0, n)),
                pl.BlockSpec((1, tn), lambda m, n: (0, n)),
            ],
            out_specs=pl.BlockSpec((tm, tn), lambda m, n: (m, n)),
        ),
        compiler_params=pltpu.CompilerParams(
            dimension_semantics=("parallel", "parallel"),
            vmem_limit_bytes=VMEM_LIMIT),
    )(x, scale, shift)


def _im2col_3x3_valid_nhwc(x):
    """x: (N, H, W, C) -> patches (N*Ho*Wo, 9*C), flattened in (kh, kw, c) order."""
    N, H, W, C = x.shape
    Ho, Wo = H - 2, W - 2
    cols = [x[:, kh:kh + Ho, kw:kw + Wo, :] for kh in range(3) for kw in range(3)]
    p = jnp.concatenate(cols, axis=-1)            # (N, Ho, Wo, 9*C)
    return p.reshape(N * Ho * Wo, 9 * C), (N, Ho, Wo)


def _prep_weight(w, cout_p, k_p):
    """w: (Cout, Cin, 3, 3) OIHW -> (k_p, cout_p) bf16 matching (kh, kw, c) im2col order."""
    cout, cin = w.shape[0], w.shape[1]
    w = jnp.pad(w.astype(jnp.float32), ((0, cout_p - cout), (0, 0), (0, 0), (0, 0)))
    w = w.transpose(2, 3, 1, 0).reshape(9 * cin, cout_p)        # (kh, kw, cin) row-major
    return jnp.pad(w, ((0, k_p - 9 * cin), (0, 0))).astype(jnp.bfloat16)


def _scale_shift_from_stats(stats, m_real, gamma, beta, cout_p):
    """Per-channel BN scale/shift from the fused conv statistics (batch stats, biased var).

    Padded patch rows are zero (and masked in the fused path), so dividing by the true
    row count is exact.  Padded channels get gamma=beta=0 -> scale=shift=0, so no
    garbage can leak through the padded lanes."""
    ssum = jnp.sum(stats[:, 0, :], axis=0)                       # (cout_p,)
    ssq = jnp.sum(stats[:, 1, :], axis=0)
    mean = ssum / m_real
    # TODO(synk): E[x^2]-E[x]^2 is cancellation-prone for huge M; fine at 1e-1 tolerance.
    var = jnp.maximum(ssq / m_real - mean * mean, 0.0)
    g = jnp.pad(gamma.astype(jnp.float32), (0, cout_p - gamma.shape[0]))
    b = jnp.pad(beta.astype(jnp.float32), (0, cout_p - beta.shape[0]))
    inv_std = lax.rsqrt(var + BN_EPS)
    scale = g * inv_std
    shift = b - mean * scale
    return scale, shift


def unet_conv2_forward(x_nchw, params):
    """UNetConv2.forward: conv1 block then conv2 block (is_batchnorm=True, ReLU)."""
    cout = params["w1"].shape[0]
    cout_p = _round_up(cout, LANE)

    x = x_nchw.transpose(0, 2, 3, 1).astype(jnp.bfloat16)        # NCHW -> NHWC (once)

    # ---- block 1: conv1 (+ fused batch-statistics collection) -----------------------
    patches1, (N, Ho1, Wo1) = _im2col_3x3_valid_nhwc(x)
    M1, K1 = patches1.shape
    Mp1 = _pad_dim(M1, TM_MAX, 16)
    Kp1 = _pad_dim(K1, TK_MAX, 16)
    patches1 = jnp.pad(patches1, ((0, Mp1 - M1), (0, Kp1 - K1)))
    w1 = _prep_weight(params["w1"], cout_p, Kp1)
    conv1_raw, stats1 = _conv_matmul_with_stats(patches1, w1, M1)
    scale1, shift1 = _scale_shift_from_stats(stats1, M1, params["g1"], params["bt1"],
                                             cout_p)

    # ---- block 2: BN1 + ReLU fused into conv2's patch transform ---------------------
    # Slice back to the REAL channel count so conv2's reduction is 9*cout, not 9*cout_p.
    y1_raw = conv1_raw[:M1, :cout].reshape(N, Ho1, Wo1, cout)     # bf16, pre-BN conv1
    patches2, (_, Ho2, Wo2) = _im2col_3x3_valid_nhwc(y1_raw)
    M2, K2 = patches2.shape
    Mp2 = _pad_dim(M2, TM_MAX, 16)
    Kp2 = _pad_dim(K2, TK_MAX, 16)
    patches2 = jnp.pad(patches2, ((0, Mp2 - M2), (0, Kp2 - K2)))
    w2 = _prep_weight(params["w2"], cout_p, Kp2)
    # Per-K-column scale/shift: the im2col K layout is (kh, kw, c) with c fastest, so the
    # per-channel BN affine repeats 9 times; padded K columns get scale=shift=0.
    ksc = jnp.pad(jnp.tile(scale1[:cout], 9), (0, Kp2 - K2)).reshape(1, Kp2)
    ksh = jnp.pad(jnp.tile(shift1[:cout], 9), (0, Kp2 - K2)).reshape(1, Kp2)
    conv2_raw, stats2 = _conv_matmul_with_stats(patches2, w2, M2, ksc, ksh)
    scale2, shift2 = _scale_shift_from_stats(stats2, M2, params["g2"], params["bt2"],
                                             cout_p)

    # ---- final BN2 + ReLU (only standalone bn_relu pass) -----------------------------
    out = _bn_relu_apply(conv2_raw, scale2.reshape(1, cout_p), shift2.reshape(1, cout_p))
    out = out[:M2, :cout].reshape(N, Ho2, Wo2, cout)
    return out.transpose(0, 3, 1, 2).astype(jnp.float32)         # NHWC -> NCHW (once)


# ------------------------------ reference ----------------------------------

def _reference_forward(x, params):
    """Pure-JAX reference (f32, with conv bias) for validation."""
    def block(x, w, b, g, bt):
        y = lax.conv_general_dilated(
            x, w, window_strides=(1, 1), padding="VALID",
            dimension_numbers=("NCHW", "OIHW", "NCHW"))
        y = y + b[None, :, None, None]
        mean = jnp.mean(y, axis=(0, 2, 3), keepdims=True)
        var = jnp.mean((y - mean) ** 2, axis=(0, 2, 3), keepdims=True)
        y = (y - mean) * lax.rsqrt(var + BN_EPS) * g[None, :, None, None] \
            + bt[None, :, None, None]
        return jnp.maximum(y, 0.0)

    y = block(x, params["w1"], params["b1"], params["g1"], params["bt1"])
    return block(y, params["w2"], params["b2"], params["g2"], params["bt2"])


def init_params(key, in_size, out_size):
    k1, k2, k3, k4 = jax.random.split(key, 4)
    w1 = 0.1 * jax.random.normal(k1, (out_size, in_size, 3, 3), jnp.float32)
    b1 = 0.01 * jax.random.normal(k2, (out_size,), jnp.float32)
    w2 = 0.1 * jax.random.normal(k3, (out_size, out_size, 3, 3), jnp.float32)
    b2 = 0.01 * jax.random.normal(k4, (out_size,), jnp.float32)
    # BatchNorm2d default init: weight=1, bias=0.
    g1 = jnp.ones((out_size,), jnp.float32)
    bt1 = jnp.zeros((out_size,), jnp.float32)
    g2 = jnp.ones((out_size,), jnp.float32)
    bt2 = jnp.zeros((out_size,), jnp.float32)
    return dict(w1=w1, b1=b1, g1=g1, bt1=bt1, w2=w2, b2=b2, g2=g2, bt2=bt2)


if __name__ == "__main__":
    key = jax.random.PRNGKey(0)
    kx, kp = jax.random.split(key)

    N, Cin, H, W = 2, 4, 16, 16
    Cout = 8

    x = jax.random.normal(kx, (N, Cin, H, W), jnp.float32)
    params = init_params(kp, Cin, Cout)

    out = jax.jit(unet_conv2_forward)(x, params)
    out = jax.block_until_ready(out)

    expected_shape = (N, Cout, H - 4, W - 4)   # two 3x3 valid convs
    assert out.shape == expected_shape, (out.shape, expected_shape)
    assert bool(jnp.all(jnp.isfinite(out)))

    ref = _reference_forward(x, params)
    assert bool(jnp.allclose(out, ref, atol=1e-1, rtol=1e-1)), \
        float(jnp.max(jnp.abs(out - ref)))

    print("KERNEL_OK")
</pallas_src>

<mosaic_0001>
module attributes {stable_mosaic.version = 11 : i64} {
  func.func @kernel(%arg0: i32, %arg1: i32, %arg2: i32, %arg3: memref<400x48xbf16, #tpu.memory_space<vmem>>, %arg4: memref<48x128xbf16, #tpu.memory_space<vmem>>, %arg5: memref<400x128xbf16, #tpu.memory_space<vmem>>, %arg6: memref<1x2x128xf32, #tpu.memory_space<vmem>>, %arg7: memref<400x128xf32, #tpu.memory_space<vmem>>) attributes {dimension_semantics = [#tpu.dimension_semantics<parallel>, #tpu.dimension_semantics<parallel>, #tpu.dimension_semantics<arbitrary>], iteration_bounds = array<i64: 1, 1, 1>, scalar_prefetch = 0 : i64, scratch_operands = 1 : i64, tpu.core_type = #tpu.core_type<tc>, window_params = [{transform_indices = @transform_0, window_bounds = array<i64: 400, 48>}, {transform_indices = @transform_1, window_bounds = array<i64: 48, 128>}, {transform_indices = @transform_2, window_bounds = array<i64: 400, 128>}, {transform_indices = @transform_3, window_bounds = array<i64: 1, 2, 128>}]} {
    %c0_i32 = arith.constant 0 : i32
    %0 = arith.cmpi eq, %arg2, %c0_i32 : i32
    %1 = arith.extui %0 : i1 to i32
    %c0_i32_0 = arith.constant 0 : i32
    %2 = arith.cmpi ne, %1, %c0_i32_0 : i32
    scf.if %2 {
      %cst_10 = arith.constant 0.000000e+00 : f32
      %12 = vector.broadcast %cst_10 : f32 to vector<400x128xf32>
      %c0_11 = arith.constant 0 : index
      %c0_12 = arith.constant 0 : index
      %13 = vector.load %arg7[%c0_11, %c0_12] : memref<400x128xf32, #tpu.memory_space<vmem>>, vector<400x128xf32>
      tpu.vector_store %arg7[%c0_11, %c0_12], %12 {strides = array<i32>} : memref<400x128xf32, #tpu.memory_space<vmem>>, vector<400x128xf32>,
    } else {
    }
    %c0 = arith.constant 0 : index
    %c0_1 = arith.constant 0 : index
    %3 = vector.load %arg3[%c0, %c0_1] : memref<400x48xbf16, #tpu.memory_space<vmem>>, vector<400x48xbf16>
    %c0_2 = arith.constant 0 : index
    %c0_3 = arith.constant 0 : index
    %4 = vector.load %arg7[%c0_2, %c0_3] : memref<400x128xf32, #tpu.memory_space<vmem>>, vector<400x128xf32>
    %c0_4 = arith.constant 0 : index
    %c0_5 = arith.constant 0 : index
    %5 = vector.load %arg4[%c0_4, %c0_5] : memref<48x128xbf16, #tpu.memory_space<vmem>>, vector<48x128xbf16>
    %cst = arith.constant dense<0.000000e+00> : vector<400x128xf32>
    %6 = tpu.matmul %3, %5, %cst {dimension_numbers = #tpu.dot_dimension_numbers<[1], [0], [0], [1], [0, 0, 1, 1], [], []>} : vector<400x48xbf16>, vector<48x128xbf16>, vector<400x128xf32> -> vector<400x128xf32>
    %7 = arith.addf %4, %6 : vector<400x128xf32>
    %c0_6 = arith.constant 0 : index
    %c0_7 = arith.constant 0 : index
    %8 = vector.load %arg7[%c0_6, %c0_7] : memref<400x128xf32, #tpu.memory_space<vmem>>, vector<400x128xf32>
    tpu.vector_store %arg7[%c0_6, %c0_7], %7 {strides = array<i32>} : memref<400x128xf32, #tpu.memory_space<vmem>>, vector<400x128xf32>,
    %c0_i32_8 = arith.constant 0 : i32
    %9 = arith.cmpi eq, %arg2, %c0_i32_8 : i32
    %10 = arith.extui %9 : i1 to i32
    %c0_i32_9 = arith.constant 0 : i32
    %11 = arith.cmpi ne, %10, %c0_i32_9 : i32
    scf.if %11 {
      %c0_10 = arith.constant 0 : index
      %c0_11 = arith.constant 0 : index
      %12 = vector.load %arg7[%c0_10, %c0_11] : memref<400x128xf32, #tpu.memory_space<vmem>>, vector<400x128xf32>
      %13 = arith.truncf %12 : vector<400x128xf32> to vector<400x128xbf16>
      %c0_12 = arith.constant 0 : index
      %c0_13 = arith.constant 0 : index
      %14 = vector.load %arg5[%c0_12, %c0_13] : memref<400x128xbf16, #tpu.memory_space<vmem>>, vector<400x128xbf16>
      tpu.vector_store %arg5[%c0_12, %c0_13], %13 {strides = array<i32>} : memref<400x128xbf16, #tpu.memory_space<vmem>>, vector<400x128xbf16>,
      %cst_14 = arith.constant dense<0.000000e+00> : vector<128xf32>
      %15 = vector.multi_reduction <add>, %12, %cst_14 [0] : vector<400x128xf32> to vector<128xf32>
      %16 = vector.shape_cast %15 : vector<128xf32> to vector<1x128xf32>
      %17 = arith.mulf %12, %12 : vector<400x128xf32>
      %cst_15 = arith.constant dense<0.000000e+00> : vector<128xf32>
      %18 = vector.multi_reduction <add>, %17, %cst_15 [0] : vector<400x128xf32> to vector<128xf32>
      %19 = vector.shape_cast %18 : vector<128xf32> to vector<1x128xf32>
      %20 = tpu.concatenate %16, %19 in 0 : vector<1x128xf32>, vector<1x128xf32> -> vector<2x128xf32>
      %21 = vector.shape_cast %20 : vector<2x128xf32> to vector<1x2x128xf32>
      %c0_16 = arith.constant 0 : index
      %c0_17 = arith.constant 0 : index
      %c0_18 = arith.constant 0 : index
      %22 = vector.load %arg6[%c0_16, %c0_17, %c0_18] : memref<1x2x128xf32, #tpu.memory_space<vmem>>, vector<1x2x128xf32>
      tpu.vector_store %arg6[%c0_16, %c0_17, %c0_18], %21 {strides = array<i32>} : memref<1x2x128xf32, #tpu.memory_space<vmem>>, vector<1x2x128xf32>,
    } else {
    }
    return
  }
  func.func @transform_0(%arg0: i32, %arg1: i32, %arg2: i32) -> (i32, i32) {
    %c0_i32 = arith.constant 0 : i32
    return %arg0, %arg2 : i32, i32
  }
  func.func @transform_1(%arg0: i32, %arg1: i32, %arg2: i32) -> (i32, i32) {
    %c0_i32 = arith.constant 0 : i32
    return %arg2, %arg1 : i32, i32
  }
  func.func @transform_2(%arg0: i32, %arg1: i32, %arg2: i32) -> (i32, i32) {
    %c0_i32 = arith.constant 0 : i32
    return %arg0, %arg1 : i32, i32
  }
  func.func @transform_3(%arg0: i32, %arg1: i32, %arg2: i32) -> (i32, i32, i32) {
    %c0_i32 = arith.constant 0 : i32
    %c0_i32_0 = arith.constant 0 : i32
    return %arg0, %c0_i32, %arg1 : i32, i32, i32
  }
}

module attributes {stable_mosaic.version = 11 : i64} {
  func.func @kernel(%arg0: i32, %arg1: i32, %arg2: i32, %arg3: memref<288x80xbf16, #tpu.memory_space<vmem>>, %arg4: memref<80x128xbf16, #tpu.memory_space<vmem>>, %arg5: memref<1x80xf32, #tpu.memory_space<vmem>>, %arg6: memref<1x80xf32, #tpu.memory_space<vmem>>, %arg7: memref<288x128xbf16, #tpu.memory_space<vmem>>, %arg8: memref<1x2x128xf32, #tpu.memory_space<vmem>>, %arg9: memref<288x128xf32, #tpu.memory_space<vmem>>) attributes {dimension_semantics = [#tpu.dimension_semantics<parallel>, #tpu.dimension_semantics<parallel>, #tpu.dimension_semantics<arbitrary>], iteration_bounds = array<i64: 1, 1, 1>, scalar_prefetch = 0 : i64, scratch_operands = 1 : i64, tpu.core_type = #tpu.core_type<tc>, window_params = [{transform_indices = @transform_0, window_bounds = array<i64: 288, 80>}, {transform_indices = @transform_1, window_bounds = array<i64: 80, 128>}, {transform_indices = @transform_2, window_bounds = array<i64: 1, 80>}, {transform_indices = @transform_3, window_bounds = array<i64: 1, 80>}, {transform_indices = @transform_4, window_bounds = array<i64: 288, 128>}, {transform_indices = @transform_5, window_bounds = array<i64: 1, 2, 128>}]} {
    %c0_i32 = arith.constant 0 : i32
    %0 = arith.cmpi eq, %arg2, %c0_i32 : i32
    %1 = arith.extui %0 : i1 to i32
    %c0_i32_0 = arith.constant 0 : i32
    %2 = arith.cmpi ne, %1, %c0_i32_0 : i32
    scf.if %2 {
      %cst_17 = arith.constant 0.000000e+00 : f32
      %32 = vector.broadcast %cst_17 : f32 to vector<288x128xf32>
      %c0_18 = arith.constant 0 : index
      %c0_19 = arith.constant 0 : index
      %33 = vector.load %arg9[%c0_18, %c0_19] : memref<288x128xf32, #tpu.memory_space<vmem>>, vector<288x128xf32>
      tpu.vector_store %arg9[%c0_18, %c0_19], %32 {strides = array<i32>} : memref<288x128xf32, #tpu.memory_space<vmem>>, vector<288x128xf32>,
    } else {
    }
    %c0 = arith.constant 0 : index
    %c0_1 = arith.constant 0 : index
    %3 = vector.load %arg3[%c0, %c0_1] : memref<288x80xbf16, #tpu.memory_space<vmem>>, vector<288x80xbf16>
    %4 = arith.extf %3 : vector<288x80xbf16> to vector<288x80xf32>
    %c0_2 = arith.constant 0 : index
    %c0_3 = arith.constant 0 : index
    %5 = vector.load %arg5[%c0_2, %c0_3] : memref<1x80xf32, #tpu.memory_space<vmem>>, vector<1x80xf32>
    %6 = vector.broadcast %5 : vector<1x80xf32> to vector<288x80xf32>
    %7 = arith.mulf %4, %6 : vector<288x80xf32>
    %c0_4 = arith.constant 0 : index
    %c0_5 = arith.constant 0 : index
    %8 = vector.load %arg6[%c0_4, %c0_5] : memref<1x80xf32, #tpu.memory_space<vmem>>, vector<1x80xf32>
    %9 = vector.broadcast %8 : vector<1x80xf32> to vector<288x80xf32>
    %10 = arith.addf %7, %9 : vector<288x80xf32>
    %cst = arith.constant 0.000000e+00 : f32
    %11 = vector.broadcast %cst : f32 to vector<288x80xf32>
    %12 = arith.maximumf %10, %11 : vector<288x80xf32>
    %c288_i32 = arith.constant 288 : i32
    %13 = arith.muli %arg0, %c288_i32 : i32
    %14 = tpu.iota {dimensions = array<i32: 0>} : vector<288x1xi32>
    %15 = vector.broadcast %13 : i32 to vector<288x1xi32>
    %16 = arith.addi %15, %14 : vector<288x1xi32>
    %c288_i32_6 = arith.constant 288 : i32
    %17 = vector.broadcast %c288_i32_6 : i32 to vector<288x1xi32>
    %18 = arith.cmpi slt, %16, %17 : vector<288x1xi32>
    %cst_7 = arith.constant 0.000000e+00 : f32
    %19 = vector.shape_cast %18 : vector<288x1xi1> to vector<288x1xi1>
    %20 = vector.broadcast %19 : vector<288x1xi1> to vector<288x80xi1>
    %21 = vector.broadcast %cst_7 : f32 to vector<288x80xf32>
    %22 = arith.select %20, %12, %21 : vector<288x80xi1>, vector<288x80xf32>
    %23 = arith.truncf %22 : vector<288x80xf32> to vector<288x80xbf16>
    %c0_8 = arith.constant 0 : index
    %c0_9 = arith.constant 0 : index
    %24 = vector.load %arg9[%c0_8, %c0_9] : memref<288x128xf32, #tpu.memory_space<vmem>>, vector<288x128xf32>
    %c0_10 = arith.constant 0 : index
    %c0_11 = arith.constant 0 : index
    %25 = vector.load %arg4[%c0_10, %c0_11] : memref<80x128xbf16, #tpu.memory_space<vmem>>, vector<80x128xbf16>
    %cst_12 = arith.constant dense<0.000000e+00> : vector<288x128xf32>
    %26 = tpu.matmul %23, %25, %cst_12 {dimension_numbers = #tpu.dot_dimension_numbers<[1], [0], [0], [1], [0, 0, 1, 1], [], []>} : vector<288x80xbf16>, vector<80x128xbf16>, vector<288x128xf32> -> vector<288x128xf32>
    %27 = arith.addf %24, %26 : vector<288x128xf32>
    %c0_13 = arith.constant 0 : index
    %c0_14 = arith.constant 0 : index
    %28 = vector.load %arg9[%c0_13, %c0_14] : memref<288x128xf32, #tpu.memory_space<vmem>>, vector<288x128xf32>
    tpu.vector_store %arg9[%c0_13, %c0_14], %27 {strides = array<i32>} : memref<288x128xf32, #tpu.memory_space<vmem>>, vector<288x128xf32>,
    %c0_i32_15 = arith.constant 0 : i32
    %29 = arith.cmpi eq, %arg2, %c0_i32_15 : i32
    %30 = arith.extui %29 : i1 to i32
    %c0_i32_16 = arith.constant 0 : i32
    %31 = arith.cmpi ne, %30, %c0_i32_16 : i32
    scf.if %31 {
      %c0_17 = arith.constant 0 : index
      %c0_18 = arith.constant 0 : index
      %32 = vector.load %arg9[%c0_17, %c0_18] : memref<288x128xf32, #tpu.memory_space<vmem>>, vector<288x128xf32>
      %33 = arith.truncf %32 : vector<288x128xf32> to vector<288x128xbf16>
      %c0_19 = arith.constant 0 : index
      %c0_20 = arith.constant 0 : index
      %34 = vector.load %arg7[%c0_19, %c0_20] : memref<288x128xbf16, #tpu.memory_space<vmem>>, vector<288x128xbf16>
      tpu.vector_store %arg7[%c0_19, %c0_20], %33 {strides = array<i32>} : memref<288x128xbf16, #tpu.memory_space<vmem>>, vector<288x128xbf16>,
      %cst_21 = arith.constant dense<0.000000e+00> : vector<128xf32>
      %35 = vector.multi_reduction <add>, %32, %cst_21 [0] : vector<288x128xf32> to vector<128xf32>
      %36 = vector.shape_cast %35 : vector<128xf32> to vector<1x128xf32>
      %37 = arith.mulf %32, %32 : vector<288x128xf32>
      %cst_22 = arith.constant dense<0.000000e+00> : vector<128xf32>
      %38 = vector.multi_reduction <add>, %37, %cst_22 [0] : vector<288x128xf32> to vector<128xf32>
      %39 = vector.shape_cast %38 : vector<128xf32> to vector<1x128xf32>
      %40 = tpu.concatenate %36, %39 in 0 : vector<1x128xf32>, vector<1x128xf32> -> vector<2x128xf32>
      %41 = vector.shape_cast %40 : vector<2x128xf32> to vector<1x2x128xf32>
      %c0_23 = arith.constant 0 : index
      %c0_24 = arith.constant 0 : index
      %c0_25 = arith.constant 0 : index
      %42 = vector.load %arg8[%c0_23, %c0_24, %c0_25] : memref<1x2x128xf32, #tpu.memory_space<vmem>>, vector<1x2x128xf32>
      tpu.vector_store %arg8[%c0_23, %c0_24, %c0_25], %41 {strides = array<i32>} : memref<1x2x128xf32, #tpu.memory_space<vmem>>, vector<1x2x128xf32>,
    } else {
    }
    return
  }
  func.func @transform_0(%arg0: i32, %arg1: i32, %arg2: i32) -> (i32, i32) {
    %c0_i32 = arith.constant 0 : i32
    return %arg0, %arg2 : i32, i32
  }
  func.func @transform_1(%arg0: i32, %arg1: i32, %arg2: i32) -> (i32, i32) {
    %c0_i32 = arith.constant 0 : i32
    return %arg2, %arg1 : i32, i32
  }
  func.func @transform_2(%arg0: i32, %arg1: i32, %arg2: i32) -> (i32, i32) {
    %c0_i32 = arith.constant 0 : i32
    %c0_i32_0 = arith.constant 0 : i32
    return %c0_i32, %arg2 : i32, i32
  }
  func.func @transform_3(%arg0: i32, %arg1: i32, %arg2: i32) -> (i32, i32) {
    %c0_i32 = arith.constant 0 : i32
    %c0_i32_0 = arith.constant 0 : i32
    return %c0_i32, %arg2 : i32, i32
  }
  func.func @transform_4(%arg0: i32, %arg1: i32, %arg2: i32) -> (i32, i32) {
    %c0_i32 = arith.constant 0 : i32
    return %arg0, %arg1 : i32, i32
  }
  func.func @transform_5(%arg0: i32, %arg1: i32, %arg2: i32) -> (i32, i32, i32) {
    %c0_i32 = arith.constant 0 : i32
    %c0_i32_0 = arith.constant 0 : i32
    return %arg0, %c0_i32, %arg1 : i32, i32, i32
  }
}

module attributes {stable_mosaic.version = 11 : i64} {
  func.func @_bn_relu_kernel(%arg0: i32, %arg1: i32, %arg2: memref<288x128xbf16, #tpu.memory_space<vmem>>, %arg3: memref<1x128xf32, #tpu.memory_space<vmem>>, %arg4: memref<1x128xf32, #tpu.memory_space<vmem>>, %arg5: memref<288x128xf32, #tpu.memory_space<vmem>>) attributes {dimension_semantics = [#tpu.dimension_semantics<parallel>, #tpu.dimension_semantics<parallel>], iteration_bounds = array<i64: 1, 1>, scalar_prefetch = 0 : i64, scratch_operands = 0 : i64, tpu.core_type = #tpu.core_type<tc>, window_params = [{transform_indices = @transform_0, window_bounds = array<i64: 288, 128>}, {transform_indices = @transform_1, window_bounds = array<i64: 1, 128>}, {transform_indices = @transform_2, window_bounds = array<i64: 1, 128>}, {transform_indices = @transform_3, window_bounds = array<i64: 288, 128>}]} {
    %c0 = arith.constant 0 : index
    %c0_0 = arith.constant 0 : index
    %0 = vector.load %arg2[%c0, %c0_0] : memref<288x128xbf16, #tpu.memory_space<vmem>>, vector<288x128xbf16>
    %1 = arith.extf %0 : vector<288x128xbf16> to vector<288x128xf32>
    %c0_1 = arith.constant 0 : index
    %c0_2 = arith.constant 0 : index
    %2 = vector.load %arg3[%c0_1, %c0_2] : memref<1x128xf32, #tpu.memory_space<vmem>>, vector<1x128xf32>
    %3 = vector.broadcast %2 : vector<1x128xf32> to vector<288x128xf32>
    %4 = arith.mulf %1, %3 : vector<288x128xf32>
    %c0_3 = arith.constant 0 : index
    %c0_4 = arith.constant 0 : index
    %5 = vector.load %arg4[%c0_3, %c0_4] : memref<1x128xf32, #tpu.memory_space<vmem>>, vector<1x128xf32>
    %6 = vector.broadcast %5 : vector<1x128xf32> to vector<288x128xf32>
    %7 = arith.addf %4, %6 : vector<288x128xf32>
    %cst = arith.constant 0.000000e+00 : f32
    %8 = vector.broadcast %cst : f32 to vector<288x128xf32>
    %9 = arith.maximumf %7, %8 : vector<288x128xf32>
    %c0_5 = arith.constant 0 : index
    %c0_6 = arith.constant 0 : index
    %10 = vector.load %arg5[%c0_5, %c0_6] : memref<288x128xf32, #tpu.memory_space<vmem>>, vector<288x128xf32>
    tpu.vector_store %arg5[%c0_5, %c0_6], %9 {strides = array<i32>} : memref<288x128xf32, #tpu.memory_space<vmem>>, vector<288x128xf32>,
    return
  }
  func.func @transform_0(%arg0: i32, %arg1: i32) -> (i32, i32) {
    %c0_i32 = arith.constant 0 : i32
    return %arg0, %arg1 : i32, i32
  }
  func.func @transform_1(%arg0: i32, %arg1: i32) -> (i32, i32) {
    %c0_i32 = arith.constant 0 : i32
    %c0_i32_0 = arith.constant 0 : i32
    return %c0_i32, %arg1 : i32, i32
  }
  func.func @transform_2(%arg0: i32, %arg1: i32) -> (i32, i32) {
    %c0_i32 = arith.constant 0 : i32
    %c0_i32_0 = arith.constant 0 : i32
    return %c0_i32, %arg1 : i32, i32
  }
  func.func @transform_3(%arg0: i32, %arg1: i32) -> (i32, i32) {
    %c0_i32 = arith.constant 0 : i32
    return %arg0, %arg1 : i32, i32
  }
}

</mosaic_0001>

<llo_original>
// kernel: unet_conv2_forward.3
$region0: #{unet_conv2_forward.3}
  #allocation0 [shape = 'u32[]', space=smem, size = 0x4, offset = 0x4, fixed_abs, tag = 'smem constant byte address 0x4 - core index']
  #allocation1 [shape = 'u32[72,128]{1,0:T(1,128)}', space=vmem, size = 0x9000, scoped, tag = 'internal scratch']
  #allocation2 [shape = 'f32[400,128]{1,0:T(8,128)}', space=vmem, size = 0x32000, scoped, tag = 'scratch operand']
  %s0 = inlined_call_operand.vmem [shape: bf16[400,48], index: 0, kind: input, shape index: {}]
  %s1 = inlined_call_operand.vmem [shape: bf16[48,128], index: 1, kind: input, shape index: {}]
  %s2 = inlined_call_operand.vmem [shape: bf16[400,128], index: 2, kind: output, shape index: {0}]
  %s3 = inlined_call_operand.vmem [shape: f32[1,2,128], index: 3, kind: output, shape index: {1}]
  %4 = xla_tuple %s2, %s3
  %s5 = sld [smem:[#allocation0]]
  $region34: #{unet_conv2_forward.3} parent=0
    _
  %s7 = ssub.s32 1, %s5
  %s8 = scalar_select 0, %s7, %s5
  // Predicated region
  $region2: #{unet_conv2_forward.3} parent=0 // pred_check
    _
  $region3: #{unet_conv2_forward.3} parent=0 // pred_check_branch
    %10 = sbr.rel (0) target = $region5
  $region4: #{unet_conv2_forward.3} parent=0 // pred_region
    _
  $region5: #{unet_conv2_forward.3} parent=0 // pred_fallthru
    _
  // Predicated region
  $region6: #{unet_conv2_forward.3} parent=0 // pred_check
    _
  $region7: #{unet_conv2_forward.3} parent=0 // pred_check_branch
    %12 = sbr.rel (0) target = $region9
  $region8: #{unet_conv2_forward.3} parent=0 // pred_region
    _
  $region9: #{unet_conv2_forward.3} parent=0 // pred_fallthru
    _
  %p14 = scmp.eq.s32.totalorder 0, 0
  // Predicated region
  $region10: #{unet_conv2_forward.3} parent=0 // pred_check
    %p15 = pneg %p14
  $region11: #{unet_conv2_forward.3} parent=0 // pred_check_branch
    %17 = sbr.rel (%p15) target = $region13
  $region12: #{unet_conv2_forward.3} parent=0 // pred_region
    %18 = vst [vmem:[#allocation2] sm:$0xff] 0.0
    %19 = vst [vmem:[#allocation2 + $0x8] sm:$0xff] 0.0
    %20 = vst [vmem:[#allocation2 + $0x10] sm:$0xff] 0.0
    %21 = vst [vmem:[#allocation2 + $0x18] sm:$0xff] 0.0
    %22 = vst [vmem:[#allocation2 + $0x20] sm:$0xff] 0.0
    %23 = vst [vmem:[#allocation2 + $0x28] sm:$0xff] 0.0
    %24 = vst [vmem:[#allocation2 + $0x30] sm:$0xff] 0.0
    %25 = vst [vmem:[#allocation2 + $0x38] sm:$0xff] 0.0
    %26 = vst [vmem:[#allocation2 + $0x40] sm:$0xff] 0.0
    %27 = vst [vmem:[#allocation2 + $0x48] sm:$0xff] 0.0
    %28 = vst [vmem:[#allocation2 + $0x50] sm:$0xff] 0.0
    %29 = vst [vmem:[#allocation2 + $0x58] sm:$0xff] 0.0
    %30 = vst [vmem:[#allocation2 + $0x60] sm:$0xff] 0.0
    %31 = vst [vmem:[#allocation2 + $0x68] sm:$0xff] 0.0
    %32 = vst [vmem:[#allocation2 + $0x70] sm:$0xff] 0.0
    %33 = vst [vmem:[#allocation2 + $0x78] sm:$0xff] 0.0
    %34 = vst [vmem:[#allocation2 + $0x80] sm:$0xff] 0.0
    %35 = vst [vmem:[#allocation2 + $0x88] sm:$0xff] 0.0
    %36 = vst [vmem:[#allocation2 + $0x90] sm:$0xff] 0.0
    %37 = vst [vmem:[#allocation2 + $0x98] sm:$0xff] 0.0
    %38 = vst [vmem:[#allocation2 + $0xa0] sm:$0xff] 0.0
    %39 = vst [vmem:[#allocation2 + $0xa8] sm:$0xff] 0.0
    %40 = vst [vmem:[#allocation2 + $0xb0] sm:$0xff] 0.0
    %41 = vst [vmem:[#allocation2 + $0xb8] sm:$0xff] 0.0
    %42 = vst [vmem:[#allocation2 + $0xc0] sm:$0xff] 0.0
    %43 = vst [vmem:[#allocation2 + $0xc8] sm:$0xff] 0.0
    %44 = vst [vmem:[#allocation2 + $0xd0] sm:$0xff] 0.0
    %45 = vst [vmem:[#allocation2 + $0xd8] sm:$0xff] 0.0
    %46 = vst [vmem:[#allocation2 + $0xe0] sm:$0xff] 0.0
    %47 = vst [vmem:[#allocation2 + $0xe8] sm:$0xff] 0.0
    %48 = vst [vmem:[#allocation2 + $0xf0] sm:$0xff] 0.0
    %49 = vst [vmem:[#allocation2 + $0xf8] sm:$0xff] 0.0
    %50 = vst [vmem:[#allocation2 + $0x100] sm:$0xff] 0.0
    %51 = vst [vmem:[#allocation2 + $0x108] sm:$0xff] 0.0
    %52 = vst [vmem:[#allocation2 + $0x110] sm:$0xff] 0.0
    %53 = vst [vmem:[#allocation2 + $0x118] sm:$0xff] 0.0
    %54 = vst [vmem:[#allocation2 + $0x120] sm:$0xff] 0.0
    %55 = vst [vmem:[#allocation2 + $0x128] sm:$0xff] 0.0
    %56 = vst [vmem:[#allocation2 + $0x130] sm:$0xff] 0.0
    %57 = vst [vmem:[#allocation2 + $0x138] sm:$0xff] 0.0
    %58 = vst [vmem:[#allocation2 + $0x140] sm:$0xff] 0.0
    %59 = vst [vmem:[#allocation2 + $0x148] sm:$0xff] 0.0
    %60 = vst [vmem:[#allocation2 + $0x150] sm:$0xff] 0.0
    %61 = vst [vmem:[#allocation2 + $0x158] sm:$0xff] 0.0
    %62 = vst [vmem:[#allocation2 + $0x160] sm:$0xff] 0.0
    %63 = vst [vmem:[#allocation2 + $0x168] sm:$0xff] 0.0
    %64 = vst [vmem:[#allocation2 + $0x170] sm:$0xff] 0.0
    %65 = vst [vmem:[#allocation2 + $0x178] sm:$0xff] 0.0
    %66 = vst [vmem:[#allocation2 + $0x180] sm:$0xff] 0.0
    %67 = vst [vmem:[#allocation2 + $0x188] sm:$0xff] 0.0
  $region13: #{unet_conv2_forward.3} parent=0 // pred_fallthru
    _
  %v68 = vld [vmem:[%s0] sm:$0xf]
  %v69 = vld [vmem:[%s0 + $0x4] sm:$0xf]
  %v70 = vld [vmem:[%s0 + $0x8] sm:$0xf]
  %v71 = vld [vmem:[%s0 + $0xc] sm:$0xf]
  %v72 = vld [vmem:[%s0 + $0x10] sm:$0xf]
  %v73 = vld [vmem:[%s0 + $0x14] sm:$0xf]
  %v74 = vld [vmem:[%s0 + $0x18] sm:$0xf]
  %v75 = vld [vmem:[%s0 + $0x1c] sm:$0xf]
  %v76 = vld [vmem:[%s0 + $0x20] sm:$0xf]
  %v77 = vld [vmem:[%s0 + $0x24] sm:$0xf]
  %v78 = vld [vmem:[%s0 + $0x28] sm:$0xf]
  %v79 = vld [vmem:[%s0 + $0x2c] sm:$0xf]
  %v80 = vld [vmem:[%s0 + $0x30] sm:$0xf]
  %v81 = vld [vmem:[%s0 + $0x34] sm:$0xf]
  %v82 = vld [vmem:[%s0 + $0x38] sm:$0xf]
  %v83 = vld [vmem:[%s0 + $0x3c] sm:$0xf]
  %v84 = vld [vmem:[%s0 + $0x40] sm:$0xf]
  %v85 = vld [vmem:[%s0 + $0x44] sm:$0xf]
  %v86 = vld [vmem:[%s0 + $0x48] sm:$0xf]
  %v87 = vld [vmem:[%s0 + $0x4c] sm:$0xf]
  %v88 = vld [vmem:[%s0 + $0x50] sm:$0xf]
  %v89 = vld [vmem:[%s0 + $0x54] sm:$0xf]
  %v90 = vld [vmem:[%s0 + $0x58] sm:$0xf]
  %v91 = vld [vmem:[%s0 + $0x5c] sm:$0xf]
  %v92 = vld [vmem:[%s0 + $0x60] sm:$0xf]
  %v93 = vld [vmem:[%s0 + $0x64] sm:$0xf]
  %v94 = vld [vmem:[%s0 + $0x68] sm:$0xf]
  %v95 = vld [vmem:[%s0 + $0x6c] sm:$0xf]
  %v96 = vld [vmem:[%s0 + $0x70] sm:$0xf]
  %v97 = vld [vmem:[%s0 + $0x74] sm:$0xf]
  %v98 = vld [vmem:[%s0 + $0x78] sm:$0xf]
  %v99 = vld [vmem:[%s0 + $0x7c] sm:$0xf]
  %v100 = vld [vmem:[%s0 + $0x80] sm:$0xf]
  %v101 = vld [vmem:[%s0 + $0x84] sm:$0xf]
  %v102 = vld [vmem:[%s0 + $0x88] sm:$0xf]
  %v103 = vld [vmem:[%s0 + $0x8c] sm:$0xf]
  %v104 = vld [vmem:[%s0 + $0x90] sm:$0xf]
  %v105 = vld [vmem:[%s0 + $0x94] sm:$0xf]
  %v106 = vld [vmem:[%s0 + $0x98] sm:$0xf]
  %v107 = vld [vmem:[%s0 + $0x9c] sm:$0xf]
  %v108 = vld [vmem:[%s0 + $0xa0] sm:$0xf]
  %v109 = vld [vmem:[%s0 + $0xa4] sm:$0xf]
  %v110 = vld [vmem:[%s0 + $0xa8] sm:$0xf]
  %v111 = vld [vmem:[%s0 + $0xac] sm:$0xf]
  %v112 = vld [vmem:[%s0 + $0xb0] sm:$0xf]
  %v113 = vld [vmem:[%s0 + $0xb4] sm:$0xf]
  %v114 = vld [vmem:[%s0 + $0xb8] sm:$0xf]
  %v115 = vld [vmem:[%s0 + $0xbc] sm:$0xf]
  %v116 = vld [vmem:[%s0 + $0xc0] sm:$0xf]
  %v117 = vld [vmem:[%s0 + $0xc4] sm:$0xf]
  %v118 = vld [vmem:[#allocation2] sm:$0xff]
  %v119 = vld [vmem:[#allocation2 + $0x8] sm:$0xff]
  %v120 = vld [vmem:[#allocation2 + $0x10] sm:$0xff]
  %v121 = vld [vmem:[#allocation2 + $0x18] sm:$0xff]
  %v122 = vld [vmem:[#allocation2 + $0x20] sm:$0xff]
  %v123 = vld [vmem:[#allocation2 + $0x28] sm:$0xff]
  %v124 = vld [vmem:[#allocation2 + $0x30] sm:$0xff]
  %v125 = vld [vmem:[#allocation2 + $0x38] sm:$0xff]
  %v126 = vld [vmem:[#allocation2 + $0x40] sm:$0xff]
  %v127 = vld [vmem:[#allocation2 + $0x48] sm:$0xff]
  %v128 = vld [vmem:[#allocation2 + $0x50] sm:$0xff]
  %v129 = vld [vmem:[#allocation2 + $0x58] sm:$0xff]
  %v130 = vld [vmem:[#allocation2 + $0x60] sm:$0xff]
  %v131 = vld [vmem:[#allocation2 + $0x68] sm:$0xff]
  %v132 = vld [vmem:[#allocation2 + $0x70] sm:$0xff]
  %v133 = vld [vmem:[#allocation2 + $0x78] sm:$0xff]
  %v134 = vld [vmem:[#allocation2 + $0x80] sm:$0xff]
  %v135 = vld [vmem:[#allocation2 + $0x88] sm:$0xff]
  %v136 = vld [vmem:[#allocation2 + $0x90] sm:$0xff]
  %v137 = vld [vmem:[#allocation2 + $0x98] sm:$0xff]
  %v138 = vld [vmem:[#allocation2 + $0xa0] sm:$0xff]
  %v139 = vld [vmem:[#allocation2 + $0xa8] sm:$0xff]
  %v140 = vld [vmem:[#allocation2 + $0xb0] sm:$0xff]
  %v141 = vld [vmem:[#allocation2 + $0xb8] sm:$0xff]
  %v142 = vld [vmem:[#allocation2 + $0xc0] sm:$0xff]
  %v143 = vld [vmem:[#allocation2 + $0xc8] sm:$0xff]
  %v144 = vld [vmem:[#allocation2 + $0xd0] sm:$0xff]
  %v145 = vld [vmem:[#allocation2 + $0xd8] sm:$0xff]
  %v146 = vld [vmem:[#allocation2 + $0xe0] sm:$0xff]
  %v147 = vld [vmem:[#allocation2 + $0xe8] sm:$0xff]
  %v148 = vld [vmem:[#allocation2 + $0xf0] sm:$0xff]
  %v149 = vld [vmem:[#allocation2 + $0xf8] sm:$0xff]
  %v150 = vld [vmem:[#allocation2 + $0x100] sm:$0xff]
  %v151 = vld [vmem:[#allocation2 + $0x108] sm:$0xff]
  %v152 = vld [vmem:[#allocation2 + $0x110] sm:$0xff]
  %v153 = vld [vmem:[#allocation2 + $0x118] sm:$0xff]
  %v154 = vld [vmem:[#allocation2 + $0x120] sm:$0xff]
  %v155 = vld [vmem:[#allocation2 + $0x128] sm:$0xff]
  %v156 = vld [vmem:[#allocation2 + $0x130] sm:$0xff]
  %v157 = vld [vmem:[#allocation2 + $0x138] sm:$0xff]
  %v158 = vld [vmem:[#allocation2 + $0x140] sm:$0xff]
  %v159 = vld [vmem:[#allocation2 + $0x148] sm:$0xff]
  %v160 = vld [vmem:[#allocation2 + $0x150] sm:$0xff]
  %v161 = vld [vmem:[#allocation2 + $0x158] sm:$0xff]
  %v162 = vld [vmem:[#allocation2 + $0x160] sm:$0xff]
  %v163 = vld [vmem:[#allocation2 + $0x168] sm:$0xff]
  %v164 = vld [vmem:[#allocation2 + $0x170] sm:$0xff]
  %v165 = vld [vmem:[#allocation2 + $0x178] sm:$0xff]
  %v166 = vld [vmem:[#allocation2 + $0x180] sm:$0xff]
  %v167 = vld [vmem:[#allocation2 + $0x188] sm:$0xff]
  %v168 = vld [vmem:[%s1] sm:$0xf]
  %v169 = vld [vmem:[%s1 + $0x4] sm:$0xf]
  %v170 = vld [vmem:[%s1 + $0x8] sm:$0xf]
  %v171 = vld [vmem:[%s1 + $0xc] sm:$0xf]
  %v172 = vld [vmem:[%s1 + $0x10] sm:$0xf]
  %v173 = vld [vmem:[%s1 + $0x14] sm:$0xf]
  %v224 = vunpack.c.l.b16 %v68
  %v225 = vunpack.c.l.b16 %v69
  %v226 = vunpack.c.l.b16 %v70
  %v227 = vunpack.c.l.b16 %v71
  %v228 = vunpack.c.l.b16 %v72
  %v229 = vunpack.c.l.b16 %v73
  %v230 = vunpack.c.l.b16 %v74
  %v231 = vunpack.c.l.b16 %v75
  %v232 = vunpack.c.l.b16 %v76
  %v233 = vunpack.c.l.b16 %v77
  %v234 = vunpack.c.l.b16 %v78
  %v235 = vunpack.c.l.b16 %v79
  %v236 = vunpack.c.l.b16 %v80
  %v237 = vunpack.c.l.b16 %v81
  %v238 = vunpack.c.l.b16 %v82
  %v239 = vunpack.c.l.b16 %v83
  %v240 = vunpack.c.l.b16 %v84
  %v241 = vunpack.c.l.b16 %v85
  %v242 = vunpack.c.l.b16 %v86
  %v243 = vunpack.c.l.b16 %v87
  %v244 = vunpack.c.l.b16 %v88
  %v245 = vunpack.c.l.b16 %v89
  %v246 = vunpack.c.l.b16 %v90
  %v247 = vunpack.c.l.b16 %v91
  %v248 = vunpack.c.l.b16 %v92
  %v249 = vunpack.c.l.b16 %v93
  %v250 = vunpack.c.l.b16 %v94
  %v251 = vunpack.c.l.b16 %v95
  %v252 = vunpack.c.l.b16 %v96
  %v253 = vunpack.c.l.b16 %v97
  %v254 = vunpack.c.l.b16 %v98
  %v255 = vunpack.c.l.b16 %v99
  %v256 = vunpack.c.l.b16 %v100
  %v257 = vunpack.c.l.b16 %v101
  %v258 = vunpack.c.l.b16 %v102
  %v259 = vunpack.c.l.b16 %v103
  %v260 = vunpack.c.l.b16 %v104
  %v261 = vunpack.c.l.b16 %v105
  %v262 = vunpack.c.l.b16 %v106
  %v263 = vunpack.c.l.b16 %v107
  %v264 = vunpack.c.l.b16 %v108
  %v265 = vunpack.c.l.b16 %v109
  %v266 = vunpack.c.l.b16 %v110
  %v267 = vunpack.c.l.b16 %v111
  %v268 = vunpack.c.l.b16 %v112
  %v269 = vunpack.c.l.b16 %v113
  %v270 = vunpack.c.l.b16 %v114
  %v271 = vunpack.c.l.b16 %v115
  %v272 = vunpack.c.l.b16 %v116
  %v273 = vunpack.c.l.b16 %v117
  %v274 = vpack.c.b16 %v225, %v224
  %v275 = vpack.c.b16 %v227, %v226
  %v276 = vpack.c.b16 %v229, %v228
  %v277 = vpack.c.b16 %v231, %v230
  %v278 = vpack.c.b16 %v233, %v232
  %v279 = vpack.c.b16 %v235, %v234
  %v280 = vpack.c.b16 %v237, %v236
  %v281 = vpack.c.b16 %v239, %v238
  %v282 = vpack.c.b16 %v241, %v240
  %v283 = vpack.c.b16 %v243, %v242
  %v284 = vpack.c.b16 %v245, %v244
  %v285 = vpack.c.b16 %v247, %v246
  %v286 = vpack.c.b16 %v249, %v248
  %v287 = vpack.c.b16 %v251, %v250
  %v288 = vpack.c.b16 %v253, %v252
  %v289 = vpack.c.b16 %v255, %v254
  %v290 = vpack.c.b16 %v257, %v256
  %v291 = vpack.c.b16 %v259, %v258
  %v292 = vpack.c.b16 %v261, %v260
  %v293 = vpack.c.b16 %v263, %v262
  %v294 = vpack.c.b16 %v265, %v264
  %v295 = vpack.c.b16 %v267, %v266
  %v296 = vpack.c.b16 %v269, %v268
  %v297 = vpack.c.b16 %v271, %v270
  %v298 = vpack.c.b16 %v273, %v272
  %v305 = vunpack.c.l.b16 %v168
  %v306 = vunpack.c.l.b16 %v169
  %v307 = vunpack.c.l.b16 %v170
  %v308 = vunpack.c.l.b16 %v171
  %v309 = vunpack.c.l.b16 %v172
  %v310 = vunpack.c.l.b16 %v173
  %v311 = vpack.c.b16 %v306, %v305
  %v312 = vpack.c.b16 %v308, %v307
  %v313 = vpack.c.b16 %v310, %v309
  %vm317 = vcmask 392192
  %v319 = vsel %vm317, %v274, 0
  %v322 = vsel %vm317, %v275, 0
  %v325 = vsel %vm317, %v276, 0
  %v328 = vsel %vm317, %v277, 0
  %v331 = vsel %vm317, %v278, 0
  %v334 = vsel %vm317, %v279, 0
  %v337 = vsel %vm317, %v280, 0
  %v340 = vsel %vm317, %v281, 0
  %v343 = vsel %vm317, %v282, 0
  %v346 = vsel %vm317, %v283, 0
  %v349 = vsel %vm317, %v284, 0
  %v352 = vsel %vm317, %v285, 0
  %v355 = vsel %vm317, %v286, 0
  %v358 = vsel %vm317, %v287, 0
  %v361 = vsel %vm317, %v288, 0
  %v364 = vsel %vm317, %v289, 0
  %v367 = vsel %vm317, %v290, 0
  %v370 = vsel %vm317, %v291, 0
  %v373 = vsel %vm317, %v292, 0
  %v376 = vsel %vm317, %v293, 0
  %v379 = vsel %vm317, %v294, 0
  %v382 = vsel %vm317, %v295, 0
  %v385 = vsel %vm317, %v296, 0
  %v388 = vsel %vm317, %v297, 0
  %v391 = vsel %vm317, %v298, 0
  %393 = vmatpush.bf16.msra.mxu0 0
  %394 = vmatpush.bf16.msra.mxu0 0
  %395 = vmatpush.bf16.msra.mxu0 0
  %396 = vmatpush.bf16.msra.mxu0 0
  %397 = vmatpush.bf16.msra.mxu0 0
  %398 = vmatpush.bf16.msra.mxu0 %v313
  %399 = vmatpush.bf16.msra.mxu0 %v312
  %400 = vmatpush.bf16.msra.mxu0 %v311
  %401 = vmatmul.bf16.gmra.mxu0 %v319
  %v402 = vpop.f32.mrf.mxu0
  %v403 = vadd.f32 0.0, %v402
  %v404 = vpop.f32.mrf.mxu0
  %v405 = vadd.f32 0.0, %v404
  %406 = vmatmul.bf16.gmra.mxu0 %v322
  %v407 = vpop.f32.mrf.mxu0
  %v408 = vadd.f32 0.0, %v407
  %v409 = vpop.f32.mrf.mxu0
  %v410 = vadd.f32 0.0, %v409
  %411 = vmatmul.bf16.gmra.mxu0 %v325
  %v412 = vpop.f32.mrf.mxu0
  %v413 = vadd.f32 0.0, %v412
  %v414 = vpop.f32.mrf.mxu0
  %v415 = vadd.f32 0.0, %v414
  %416 = vmatmul.bf16.gmra.mxu0 %v328
  %v417 = vpop.f32.mrf.mxu0
  %v418 = vadd.f32 0.0, %v417
  %v419 = vpop.f32.mrf.mxu0
  %v420 = vadd.f32 0.0, %v419
  %421 = vmatmul.bf16.gmra.mxu0 %v331
  %v422 = vpop.f32.mrf.mxu0
  %v423 = vadd.f32 0.0, %v422
  %v424 = vpop.f32.mrf.mxu0
  %v425 = vadd.f32 0.0, %v424
  %426 = vmatmul.bf16.gmra.mxu0 %v334
  %v427 = vpop.f32.mrf.mxu0
  %v428 = vadd.f32 0.0, %v427
  %v429 = vpop.f32.mrf.mxu0
  %v430 = vadd.f32 0.0, %v429
  %431 = vmatmul.bf16.gmra.mxu0 %v337
  %v432 = vpop.f32.mrf.mxu0
  %v433 = vadd.f32 0.0, %v432
  %v434 = vpop.f32.mrf.mxu0
  %v435 = vadd.f32 0.0, %v434
  %436 = vmatmul.bf16.gmra.mxu0 %v340
  %v437 = vpop.f32.mrf.mxu0
  %v438 = vadd.f32 0.0, %v437
  %v439 = vpop.f32.mrf.mxu0
  %v440 = vadd.f32 0.0, %v439
  %441 = vmatmul.bf16.gmra.mxu0 %v343
  %v442 = vpop.f32.mrf.mxu0
  %v443 = vadd.f32 0.0, %v442
  %v444 = vpop.f32.mrf.mxu0
  %v445 = vadd.f32 0.0, %v444
  %446 = vmatmul.bf16.gmra.mxu0 %v346
  %v447 = vpop.f32.mrf.mxu0
  %v448 = vadd.f32 0.0, %v447
  %v449 = vpop.f32.mrf.mxu0
  %v450 = vadd.f32 0.0, %v449
  %451 = vmatmul.bf16.gmra.mxu0 %v349
  %v452 = vpop.f32.mrf.mxu0
  %v453 = vadd.f32 0.0, %v452
  %v454 = vpop.f32.mrf.mxu0
  %v455 = vadd.f32 0.0, %v454
  %456 = vmatmul.bf16.gmra.mxu0 %v352
  %v457 = vpop.f32.mrf.mxu0
  %v458 = vadd.f32 0.0, %v457
  %v459 = vpop.f32.mrf.mxu0
  %v460 = vadd.f32 0.0, %v459
  %461 = vmatmul.bf16.gmra.mxu0 %v355
  %v462 = vpop.f32.mrf.mxu0
  %v463 = vadd.f32 0.0, %v462
  %v464 = vpop.f32.mrf.mxu0
  %v465 = vadd.f32 0.0, %v464
  %466 = vmatmul.bf16.gmra.mxu0 %v358
  %v467 = vpop.f32.mrf.mxu0
  %v468 = vadd.f32 0.0, %v467
  %v469 = vpop.f32.mrf.mxu0
  %v470 = vadd.f32 0.0, %v469
  %471 = vmatmul.bf16.gmra.mxu0 %v361
  %v472 = vpop.f32.mrf.mxu0
  %v473 = vadd.f32 0.0, %v472
  %v474 = vpop.f32.mrf.mxu0
  %v475 = vadd.f32 0.0, %v474
  %476 = vmatmul.bf16.gmra.mxu0 %v364
  %v477 = vpop.f32.mrf.mxu0
  %v478 = vadd.f32 0.0, %v477
  %v479 = vpop.f32.mrf.mxu0
  %v480 = vadd.f32 0.0, %v479
  %481 = vmatmul.bf16.gmra.mxu0 %v367
  %v482 = vpop.f32.mrf.mxu0
  %v483 = vadd.f32 0.0, %v482
  %v484 = vpop.f32.mrf.mxu0
  %v485 = vadd.f32 0.0, %v484
  %486 = vmatmul.bf16.gmra.mxu0 %v370
  %v487 = vpop.f32.mrf.mxu0
  %v488 = vadd.f32 0.0, %v487
  %v489 = vpop.f32.mrf.mxu0
  %v490 = vadd.f32 0.0, %v489
  %491 = vmatmul.bf16.gmra.mxu0 %v373
  %v492 = vpop.f32.mrf.mxu0
  %v493 = vadd.f32 0.0, %v492
  %v494 = vpop.f32.mrf.mxu0
  %v495 = vadd.f32 0.0, %v494
  %496 = vmatmul.bf16.gmra.mxu0 %v376
  %v497 = vpop.f32.mrf.mxu0
  %v498 = vadd.f32 0.0, %v497
  %v499 = vpop.f32.mrf.mxu0
  %v500 = vadd.f32 0.0, %v499
  %501 = vmatmul.bf16.gmra.mxu0 %v379
  %v502 = vpop.f32.mrf.mxu0
  %v503 = vadd.f32 0.0, %v502
  %v504 = vpop.f32.mrf.mxu0
  %v505 = vadd.f32 0.0, %v504
  %506 = vmatmul.bf16.gmra.mxu0 %v382
  %v507 = vpop.f32.mrf.mxu0
  %v508 = vadd.f32 0.0, %v507
  %v509 = vpop.f32.mrf.mxu0
  %v510 = vadd.f32 0.0, %v509
  %511 = vmatmul.bf16.gmra.mxu0 %v385
  %v512 = vpop.f32.mrf.mxu0
  %v513 = vadd.f32 0.0, %v512
  %v514 = vpop.f32.mrf.mxu0
  %v515 = vadd.f32 0.0, %v514
  %516 = vmatmul.bf16.gmra.mxu0 %v388
  %v517 = vpop.f32.mrf.mxu0
  %v518 = vadd.f32 0.0, %v517
  %v519 = vpop.f32.mrf.mxu0
  %v520 = vadd.f32 0.0, %v519
  %521 = vmatmul.bf16.gmra.mxu0 %v391
  %v522 = vpop.f32.mrf.mxu0
  %v523 = vadd.f32 0.0, %v522
  %v524 = vpop.f32.mrf.mxu0
  %v525 = vadd.f32 0.0, %v524
  %526 = vdwg.mxu0
  %v527 = vadd.f32 %v118, %v403
  %v528 = vadd.f32 %v119, %v405
  %v529 = vadd.f32 %v120, %v408
  %v530 = vadd.f32 %v121, %v410
  %v531 = vadd.f32 %v122, %v413
  %v532 = vadd.f32 %v123, %v415
  %v533 = vadd.f32 %v124, %v418
  %v534 = vadd.f32 %v125, %v420
  %v535 = vadd.f32 %v126, %v423
  %v536 = vadd.f32 %v127, %v425
  %v537 = vadd.f32 %v128, %v428
  %v538 = vadd.f32 %v129, %v430
  %v539 = vadd.f32 %v130, %v433
  %v540 = vadd.f32 %v131, %v435
  %v541 = vadd.f32 %v132, %v438
  %v542 = vadd.f32 %v133, %v440
  %v543 = vadd.f32 %v134, %v443
  %v544 = vadd.f32 %v135, %v445
  %v545 = vadd.f32 %v136, %v448
  %v546 = vadd.f32 %v137, %v450
  %v547 = vadd.f32 %v138, %v453
  %v548 = vadd.f32 %v139, %v455
  %v549 = vadd.f32 %v140, %v458
  %v550 = vadd.f32 %v141, %v460
  %v551 = vadd.f32 %v142, %v463
  %v552 = vadd.f32 %v143, %v465
  %v553 = vadd.f32 %v144, %v468
  %v554 = vadd.f32 %v145, %v470
  %v555 = vadd.f32 %v146, %v473
  %v556 = vadd.f32 %v147, %v475
  %v557 = vadd.f32 %v148, %v478
  %v558 = vadd.f32 %v149, %v480
  %v559 = vadd.f32 %v150, %v483
  %v560 = vadd.f32 %v151, %v485
  %v561 = vadd.f32 %v152, %v488
  %v562 = vadd.f32 %v153, %v490
  %v563 = vadd.f32 %v154, %v493
  %v564 = vadd.f32 %v155, %v495
  %v565 = vadd.f32 %v156, %v498
  %v566 = vadd.f32 %v157, %v500
  %v567 = vadd.f32 %v158, %v503
  %v568 = vadd.f32 %v159, %v505
  %v569 = vadd.f32 %v160, %v508
  %v570 = vadd.f32 %v161, %v510
  %v571 = vadd.f32 %v162, %v513
  %v572 = vadd.f32 %v163, %v515
  %v573 = vadd.f32 %v164, %v518
  %v574 = vadd.f32 %v165, %v520
  %v575 = vadd.f32 %v166, %v523
  %v576 = vadd.f32 %v167, %v525
  %577 = vst [vmem:[#allocation2] sm:$0xff] %v527
  %578 = vst [vmem:[#allocation2 + $0x8] sm:$0xff] %v528
  %579 = vst [vmem:[#allocation2 + $0x10] sm:$0xff] %v529
  %580 = vst [vmem:[#allocation2 + $0x18] sm:$0xff] %v530
  %581 = vst [vmem:[#allocation2 + $0x20] sm:$0xff] %v531
  %582 = vst [vmem:[#allocation2 + $0x28] sm:$0xff] %v532
  %583 = vst [vmem:[#allocation2 + $0x30] sm:$0xff] %v533
  %584 = vst [vmem:[#allocation2 + $0x38] sm:$0xff] %v534
  %585 = vst [vmem:[#allocation2 + $0x40] sm:$0xff] %v535
  %586 = vst [vmem:[#allocation2 + $0x48] sm:$0xff] %v536
  %587 = vst [vmem:[#allocation2 + $0x50] sm:$0xff] %v537
  %588 = vst [vmem:[#allocation2 + $0x58] sm:$0xff] %v538
  %589 = vst [vmem:[#allocation2 + $0x60] sm:$0xff] %v539
  %590 = vst [vmem:[#allocation2 + $0x68] sm:$0xff] %v540
  %591 = vst [vmem:[#allocation2 + $0x70] sm:$0xff] %v541
  %592 = vst [vmem:[#allocation2 + $0x78] sm:$0xff] %v542
  %593 = vst [vmem:[#allocation2 + $0x80] sm:$0xff] %v543
  %594 = vst [vmem:[#allocation2 + $0x88] sm:$0xff] %v544
  %595 = vst [vmem:[#allocation2 + $0x90] sm:$0xff] %v545
  %596 = vst [vmem:[#allocation2 + $0x98] sm:$0xff] %v546
  %597 = vst [vmem:[#allocation2 + $0xa0] sm:$0xff] %v547
  %598 = vst [vmem:[#allocation2 + $0xa8] sm:$0xff] %v548
  %599 = vst [vmem:[#allocation2 + $0xb0] sm:$0xff] %v549
  %600 = vst [vmem:[#allocation2 + $0xb8] sm:$0xff] %v550
  %601 = vst [vmem:[#allocation2 + $0xc0] sm:$0xff] %v551
  %602 = vst [vmem:[#allocation2 + $0xc8] sm:$0xff] %v552
  %603 = vst [vmem:[#allocation2 + $0xd0] sm:$0xff] %v553
  %604 = vst [vmem:[#allocation2 + $0xd8] sm:$0xff] %v554
  %605 = vst [vmem:[#allocation2 + $0xe0] sm:$0xff] %v555
  %606 = vst [vmem:[#allocation2 + $0xe8] sm:$0xff] %v556
  %607 = vst [vmem:[#allocation2 + $0xf0] sm:$0xff] %v557
  %608 = vst [vmem:[#allocation2 + $0xf8] sm:$0xff] %v558
  %609 = vst [vmem:[#allocation2 + $0x100] sm:$0xff] %v559
  %610 = vst [vmem:[#allocation2 + $0x108] sm:$0xff] %v560
  %611 = vst [vmem:[#allocation2 + $0x110] sm:$0xff] %v561
  %612 = vst [vmem:[#allocation2 + $0x118] sm:$0xff] %v562
  %613 = vst [vmem:[#allocation2 + $0x120] sm:$0xff] %v563
  %614 = vst [vmem:[#allocation2 + $0x128] sm:$0xff] %v564
  %615 = vst [vmem:[#allocation2 + $0x130] sm:$0xff] %v565
  %616 = vst [vmem:[#allocation2 + $0x138] sm:$0xff] %v566
  %617 = vst [vmem:[#allocation2 + $0x140] sm:$0xff] %v567
  %618 = vst [vmem:[#allocation2 + $0x148] sm:$0xff] %v568
  %619 = vst [vmem:[#allocation2 + $0x150] sm:$0xff] %v569
  %620 = vst [vmem:[#allocation2 + $0x158] sm:$0xff] %v570
  %621 = vst [vmem:[#allocation2 + $0x160] sm:$0xff] %v571
  %622 = vst [vmem:[#allocation2 + $0x168] sm:$0xff] %v572
  %623 = vst [vmem:[#allocation2 + $0x170] sm:$0xff] %v573
  %624 = vst [vmem:[#allocation2 + $0x178] sm:$0xff] %v574
  %625 = vst [vmem:[#allocation2 + $0x180] sm:$0xff] %v575
  %626 = vst [vmem:[#allocation2 + $0x188] sm:$0xff] %v576
  // Predicated region
  $region14: #{unet_conv2_forward.3} parent=0 // pred_check
    %p627 = pneg %p14
  $region15: #{unet_conv2_forward.3} parent=0 // pred_check_branch
    %629 = sbr.rel (%p627) target = $region17
  $region16: #{unet_conv2_forward.3} parent=0 // pred_region
    %v630 = vld [vmem:[#allocation2] sm:$0xff]
    %v631 = vld [vmem:[#allocation2 + $0x8] sm:$0xff]
    %v632 = vld [vmem:[#allocation2 + $0x10] sm:$0xff]
    %v633 = vld [vmem:[#allocation2 + $0x18] sm:$0xff]
    %v634 = vld [vmem:[#allocation2 + $0x20] sm:$0xff]
    %v635 = vld [vmem:[#allocation2 + $0x28] sm:$0xff]
    %v636 = vld [vmem:[#allocation2 + $0x30] sm:$0xff]
    %v637 = vld [vmem:[#allocation2 + $0x38] sm:$0xff]
    %v638 = vld [vmem:[#allocation2 + $0x40] sm:$0xff]
    %v639 = vld [vmem:[#allocation2 + $0x48] sm:$0xff]
    %v640 = vld [vmem:[#allocation2 + $0x50] sm:$0xff]
    %v641 = vld [vmem:[#allocation2 + $0x58] sm:$0xff]
    %v642 = vld [vmem:[#allocation2 + $0x60] sm:$0xff]
    %v643 = vld [vmem:[#allocation2 + $0x68] sm:$0xff]
    %v644 = vld [vmem:[#allocation2 + $0x70] sm:$0xff]
    %v645 = vld [vmem:[#allocation2 + $0x78] sm:$0xff]
    %v646 = vld [vmem:[#allocation2 + $0x80] sm:$0xff]
    %v647 = vld [vmem:[#allocation2 + $0x88] sm:$0xff]
    %v648 = vld [vmem:[#allocation2 + $0x90] sm:$0xff]
    %v649 = vld [vmem:[#allocation2 + $0x98] sm:$0xff]
    %v650 = vld [vmem:[#allocation2 + $0xa0] sm:$0xff]
    %v651 = vld [vmem:[#allocation2 + $0xa8] sm:$0xff]
    %v652 = vld [vmem:[#allocation2 + $0xb0] sm:$0xff]
    %v653 = vld [vmem:[#allocation2 + $0xb8] sm:$0xff]
    %v654 = vld [vmem:[#allocation2 + $0xc0] sm:$0xff]
    %v655 = vld [vmem:[#allocation2 + $0xc8] sm:$0xff]
    %v656 = vld [vmem:[#allocation2 + $0xd0] sm:$0xff]
    %v657 = vld [vmem:[#allocation2 + $0xd8] sm:$0xff]
    %v658 = vld [vmem:[#allocation2 + $0xe0] sm:$0xff]
    %v659 = vld [vmem:[#allocation2 + $0xe8] sm:$0xff]
    %v660 = vld [vmem:[#allocation2 + $0xf0] sm:$0xff]
    %v661 = vld [vmem:[#allocation2 + $0xf8] sm:$0xff]
    %v662 = vld [vmem:[#allocation2 + $0x100] sm:$0xff]
    %v663 = vld [vmem:[#allocation2 + $0x108] sm:$0xff]
    %v664 = vld [vmem:[#allocation2 + $0x110] sm:$0xff]
    %v665 = vld [vmem:[#allocation2 + $0x118] sm:$0xff]
    %v666 = vld [vmem:[#allocation2 + $0x120] sm:$0xff]
    %v667 = vld [vmem:[#allocation2 + $0x128] sm:$0xff]
    %v668 = vld [vmem:[#allocation2 + $0x130] sm:$0xff]
    %v669 = vld [vmem:[#allocation2 + $0x138] sm:$0xff]
    %v670 = vld [vmem:[#allocation2 + $0x140] sm:$0xff]
    %v671 = vld [vmem:[#allocation2 + $0x148] sm:$0xff]
    %v672 = vld [vmem:[#allocation2 + $0x150] sm:$0xff]
    %v673 = vld [vmem:[#allocation2 + $0x158] sm:$0xff]
    %v674 = vld [vmem:[#allocation2 + $0x160] sm:$0xff]
    %v675 = vld [vmem:[#allocation2 + $0x168] sm:$0xff]
    %v676 = vld [vmem:[#allocation2 + $0x170] sm:$0xff]
    %v677 = vld [vmem:[#allocation2 + $0x178] sm:$0xff]
    %v678 = vld [vmem:[#allocation2 + $0x180] sm:$0xff]
    %v679 = vld [vmem:[#allocation2 + $0x188] sm:$0xff]
    %v680 = vpack.c.bf16 %v630, %v630
    %v681 = vpack.c.bf16 %v631, %v631
    %v682 = vpack.c.bf16 %v632, %v632
    %v683 = vpack.c.bf16 %v633, %v633
    %v684 = vpack.c.bf16 %v634, %v634
    %v685 = vpack.c.bf16 %v635, %v635
    %v686 = vpack.c.bf16 %v636, %v636
    %v687 = vpack.c.bf16 %v637, %v637
    %v688 = vpack.c.bf16 %v638, %v638
    %v689 = vpack.c.bf16 %v639, %v639
    %v690 = vpack.c.bf16 %v640, %v640
    %v691 = vpack.c.bf16 %v641, %v641
    %v692 = vpack.c.bf16 %v642, %v642
    %v693 = vpack.c.bf16 %v643, %v643
    %v694 = vpack.c.bf16 %v644, %v644
    %v695 = vpack.c.bf16 %v645, %v645
    %v696 = vpack.c.bf16 %v646, %v646
    %v697 = vpack.c.bf16 %v647, %v647
    %v698 = vpack.c.bf16 %v648, %v648
    %v699 = vpack.c.bf16 %v649, %v649
    %v700 = vpack.c.bf16 %v650, %v650
    %v701 = vpack.c.bf16 %v651, %v651
    %v702 = vpack.c.bf16 %v652, %v652
    %v703 = vpack.c.bf16 %v653, %v653
    %v704 = vpack.c.bf16 %v654, %v654
    %v705 = vpack.c.bf16 %v655, %v655
    %v706 = vpack.c.bf16 %v656, %v656
    %v707 = vpack.c.bf16 %v657, %v657
    %v708 = vpack.c.bf16 %v658, %v658
    %v709 = vpack.c.bf16 %v659, %v659
    %v710 = vpack.c.bf16 %v660, %v660
    %v711 = vpack.c.bf16 %v661, %v661
    %v712 = vpack.c.bf16 %v662, %v662
    %v713 = vpack.c.bf16 %v663, %v663
    %v714 = vpack.c.bf16 %v664, %v664
    %v715 = vpack.c.bf16 %v665, %v665
    %v716 = vpack.c.bf16 %v666, %v666
    %v717 = vpack.c.bf16 %v667, %v667
    %v718 = vpack.c.bf16 %v668, %v668
    %v719 = vpack.c.bf16 %v669, %v669
    %v720 = vpack.c.bf16 %v670, %v670
    %v721 = vpack.c.bf16 %v671, %v671
    %v722 = vpack.c.bf16 %v672, %v672
    %v723 = vpack.c.bf16 %v673, %v673
    %v724 = vpack.c.bf16 %v674, %v674
    %v725 = vpack.c.bf16 %v675, %v675
    %v726 = vpack.c.bf16 %v676, %v676
    %v727 = vpack.c.bf16 %v677, %v677
    %v728 = vpack.c.bf16 %v678, %v678
    %v729 = vpack.c.bf16 %v679, %v679
    %730 = vst [vmem:[%s2] sm:$0xf] %v680
    %731 = vst [vmem:[%s2 + $0x4] sm:$0xf] %v681
    %732 = vst [vmem:[%s2 + $0x8] sm:$0xf] %v682
    %733 = vst [vmem:[%s2 + $0xc] sm:$0xf] %v683
    %734 = vst [vmem:[%s2 + $0x10] sm:$0xf] %v684
    %735 = vst [vmem:[%s2 + $0x14] sm:$0xf] %v685
    %736 = vst [vmem:[%s2 + $0x18] sm:$0xf] %v686
    %737 = vst [vmem:[%s2 + $0x1c] sm:$0xf] %v687
    %738 = vst [vmem:[%s2 + $0x20] sm:$0xf] %v688
    %739 = vst [vmem:[%s2 + $0x24] sm:$0xf] %v689
    %740 = vst [vmem:[%s2 + $0x28] sm:$0xf] %v690
    %741 = vst [vmem:[%s2 + $0x2c] sm:$0xf] %v691
    %742 = vst [vmem:[%s2 + $0x30] sm:$0xf] %v692
    %743 = vst [vmem:[%s2 + $0x34] sm:$0xf] %v693
    %744 = vst [vmem:[%s2 + $0x38] sm:$0xf] %v694
    %745 = vst [vmem:[%s2 + $0x3c] sm:$0xf] %v695
    %746 = vst [vmem:[%s2 + $0x40] sm:$0xf] %v696
    %747 = vst [vmem:[%s2 + $0x44] sm:$0xf] %v697
    %748 = vst [vmem:[%s2 + $0x48] sm:$0xf] %v698
    %749 = vst [vmem:[%s2 + $0x4c] sm:$0xf] %v699
    %750 = vst [vmem:[%s2 + $0x50] sm:$0xf] %v700
    %751 = vst [vmem:[%s2 + $0x54] sm:$0xf] %v701
    %752 = vst [vmem:[%s2 + $0x58] sm:$0xf] %v702
    %753 = vst [vmem:[%s2 + $0x5c] sm:$0xf] %v703
    %754 = vst [vmem:[%s2 + $0x60] sm:$0xf] %v704
    %755 = vst [vmem:[%s2 + $0x64] sm:$0xf] %v705
    %756 = vst [vmem:[%s2 + $0x68] sm:$0xf] %v706
    %757 = vst [vmem:[%s2 + $0x6c] sm:$0xf] %v707
    %758 = vst [vmem:[%s2 + $0x70] sm:$0xf] %v708
    %759 = vst [vmem:[%s2 + $0x74] sm:$0xf] %v709
    %760 = vst [vmem:[%s2 + $0x78] sm:$0xf] %v710
    %761 = vst [vmem:[%s2 + $0x7c] sm:$0xf] %v711
    %762 = vst [vmem:[%s2 + $0x80] sm:$0xf] %v712
    %763 = vst [vmem:[%s2 + $0x84] sm:$0xf] %v713
    %764 = vst [vmem:[%s2 + $0x88] sm:$0xf] %v714
    %765 = vst [vmem:[%s2 + $0x8c] sm:$0xf] %v715
    %766 = vst [vmem:[%s2 + $0x90] sm:$0xf] %v716
    %767 = vst [vmem:[%s2 + $0x94] sm:$0xf] %v717
    %768 = vst [vmem:[%s2 + $0x98] sm:$0xf] %v718
    %769 = vst [vmem:[%s2 + $0x9c] sm:$0xf] %v719
    %770 = vst [vmem:[%s2 + $0xa0] sm:$0xf] %v720
    %771 = vst [vmem:[%s2 + $0xa4] sm:$0xf] %v721
    %772 = vst [vmem:[%s2 + $0xa8] sm:$0xf] %v722
    %773 = vst [vmem:[%s2 + $0xac] sm:$0xf] %v723
    %774 = vst [vmem:[%s2 + $0xb0] sm:$0xf] %v724
    %775 = vst [vmem:[%s2 + $0xb4] sm:$0xf] %v725
    %776 = vst [vmem:[%s2 + $0xb8] sm:$0xf] %v726
    %777 = vst [vmem:[%s2 + $0xbc] sm:$0xf] %v727
    %778 = vst [vmem:[%s2 + $0xc0] sm:$0xf] %v728
    %779 = vst [vmem:[%s2 + $0xc4] sm:$0xf] %v729
    %v780 = vadd.f32 %v630, %v631
    %v781 = vadd.f32 %v780, %v632
    %v782 = vadd.f32 %v781, %v633
    %v783 = vadd.f32 %v782, %v634
    %v784 = vadd.f32 %v783, %v635
    %v785 = vadd.f32 %v784, %v636
    %v786 = vadd.f32 %v785, %v637
    %v787 = vadd.f32 %v786, %v638
    %v788 = vadd.f32 %v787, %v639
    %v789 = vadd.f32 %v788, %v640
    %v790 = vadd.f32 %v789, %v641
    %v791 = vadd.f32 %v790, %v642
    %v792 = vadd.f32 %v791, %v643
    %v793 = vadd.f32 %v792, %v644
    %v794 = vadd.f32 %v793, %v645
    %v795 = vadd.f32 %v794, %v646
    %v796 = vadd.f32 %v795, %v647
    %v797 = vadd.f32 %v796, %v648
    %v798 = vadd.f32 %v797, %v649
    %v799 = vadd.f32 %v798, %v650
    %v800 = vadd.f32 %v799, %v651
    %v801 = vadd.f32 %v800, %v652
    %v802 = vadd.f32 %v801, %v653
    %v803 = vadd.f32 %v802, %v654
    %v804 = vadd.f32 %v803, %v655
    %v805 = vadd.f32 %v804, %v656
    %v806 = vadd.f32 %v805, %v657
    %v807 = vadd.f32 %v806, %v658
    %v808 = vadd.f32 %v807, %v659
    %v809 = vadd.f32 %v808, %v660
    %v810 = vadd.f32 %v809, %v661
    %v811 = vadd.f32 %v810, %v662
    %v812 = vadd.f32 %v811, %v663
    %v813 = vadd.f32 %v812, %v664
    %v814 = vadd.f32 %v813, %v665
    %v815 = vadd.f32 %v814, %v666
    %v816 = vadd.f32 %v815, %v667
    %v817 = vadd.f32 %v816, %v668
    %v818 = vadd.f32 %v817, %v669
    %v819 = vadd.f32 %v818, %v670
    %v820 = vadd.f32 %v819, %v671
    %v821 = vadd.f32 %v820, %v672
    %v822 = vadd.f32 %v821, %v673
    %v823 = vadd.f32 %v822, %v674
    %v824 = vadd.f32 %v823, %v675
    %v825 = vadd.f32 %v824, %v676
    %v826 = vadd.f32 %v825, %v677
    %v827 = vadd.f32 %v826, %v678
    %v828 = vadd.f32 %v827, %v679
    %v829 = vrot.slane %v828, 4
    %v830 = vadd.f32 %v828, %v829
    %v831 = vrot.slane %v830, 2
    %v832 = vadd.f32 %v830, %v831
    %v833 = vrot.slane %v832, 1
    %v834 = vadd.f32 %v832, %v833
    %v835 = vmul.f32 %v630, %v630
    %v836 = vmul.f32 %v631, %v631
    %v837 = vmul.f32 %v632, %v632
    %v838 = vmul.f32 %v633, %v633
    %v839 = vmul.f32 %v634, %v634
    %v840 = vmul.f32 %v635, %v635
    %v841 = vmul.f32 %v636, %v636
    %v842 = vmul.f32 %v637, %v637
    %v843 = vmul.f32 %v638, %v638
    %v844 = vmul.f32 %v639, %v639
    %v845 = vmul.f32 %v640, %v640
    %v846 = vmul.f32 %v641, %v641
    %v847 = vmul.f32 %v642, %v642
    %v848 = vmul.f32 %v643, %v643
    %v849 = vmul.f32 %v644, %v644
    %v850 = vmul.f32 %v645, %v645
    %v851 = vmul.f32 %v646, %v646
    %v852 = vmul.f32 %v647, %v647
    %v853 = vmul.f32 %v648, %v648
    %v854 = vmul.f32 %v649, %v649
    %v855 = vmul.f32 %v650, %v650
    %v856 = vmul.f32 %v651, %v651
    %v857 = vmul.f32 %v652, %v652
    %v858 = vmul.f32 %v653, %v653
    %v859 = vmul.f32 %v654, %v654
    %v860 = vmul.f32 %v655, %v655
    %v861 = vmul.f32 %v656, %v656
    %v862 = vmul.f32 %v657, %v657
    %v863 = vmul.f32 %v658, %v658
    %v864 = vmul.f32 %v659, %v659
    %v865 = vmul.f32 %v660, %v660
    %v866 = vmul.f32 %v661, %v661
    %v867 = vmul.f32 %v662, %v662
    %v868 = vmul.f32 %v663, %v663
    %v869 = vmul.f32 %v664, %v664
    %v870 = vmul.f32 %v665, %v665
    %v871 = vmul.f32 %v666, %v666
    %v872 = vmul.f32 %v667, %v667
    %v873 = vmul.f32 %v668, %v668
    %v874 = vmul.f32 %v669, %v669
    %v875 = vmul.f32 %v670, %v670
    %v876 = vmul.f32 %v671, %v671
    %v877 = vmul.f32 %v672, %v672
    %v878 = vmul.f32 %v673, %v673
    %v879 = vmul.f32 %v674, %v674
    %v880 = vmul.f32 %v675, %v675
    %v881 = vmul.f32 %v676, %v676
    %v882 = vmul.f32 %v677, %v677
    %v883 = vmul.f32 %v678, %v678
    %v884 = vmul.f32 %v679, %v679
    %v885 = vadd.f32 %v835, %v836
    %v886 = vadd.f32 %v885, %v837
    %v887 = vadd.f32 %v886, %v838
    %v888 = vadd.f32 %v887, %v839
    %v889 = vadd.f32 %v888, %v840
    %v890 = vadd.f32 %v889, %v841
    %v891 = vadd.f32 %v890, %v842
    %v892 = vadd.f32 %v891, %v843
    %v893 = vadd.f32 %v892, %v844
    %v894 = vadd.f32 %v893, %v845
    %v895 = vadd.f32 %v894, %v846
    %v896 = vadd.f32 %v895, %v847
    %v897 = vadd.f32 %v896, %v848
    %v898 = vadd.f32 %v897, %v849
    %v899 = vadd.f32 %v898, %v850
    %v900 = vadd.f32 %v899, %v851
    %v901 = vadd.f32 %v900, %v852
    %v902 = vadd.f32 %v901, %v853
    %v903 = vadd.f32 %v902, %v854
    %v904 = vadd.f32 %v903, %v855
    %v905 = vadd.f32 %v904, %v856
    %v906 = vadd.f32 %v905, %v857
    %v907 = vadd.f32 %v906, %v858
    %v908 = vadd.f32 %v907, %v859
    %v909 = vadd.f32 %v908, %v860
    %v910 = vadd.f32 %v909, %v861
    %v911 = vadd.f32 %v910, %v862
    %v912 = vadd.f32 %v911, %v863
    %v913 = vadd.f32 %v912, %v864
    %v914 = vadd.f32 %v913, %v865
    %v915 = vadd.f32 %v914, %v866
    %v916 = vadd.f32 %v915, %v867
    %v917 = vadd.f32 %v916, %v868
    %v918 = vadd.f32 %v917, %v869
    %v919 = vadd.f32 %v918, %v870
    %v920 = vadd.f32 %v919, %v871
    %v921 = vadd.f32 %v920, %v872
    %v922 = vadd.f32 %v921, %v873
    %v923 = vadd.f32 %v922, %v874
    %v924 = vadd.f32 %v923, %v875
    %v925 = vadd.f32 %v924, %v876
    %v926 = vadd.f32 %v925, %v877
    %v927 = vadd.f32 %v926, %v878
    %v928 = vadd.f32 %v927, %v879
    %v929 = vadd.f32 %v928, %v880
    %v930 = vadd.f32 %v929, %v881
    %v931 = vadd.f32 %v930, %v882
    %v932 = vadd.f32 %v931, %v883
    %v933 = vadd.f32 %v932, %v884
    %v934 = vrot.slane %v933, 4
    %v935 = vadd.f32 %v933, %v934
    %v936 = vrot.slane %v935, 2
    %v937 = vadd.f32 %v935, %v936
    %v938 = vrot.slane %v937, 1
    %v939 = vadd.f32 %v937, %v938
    %vm940 = vcmask 1040384
    %v941 = vsel %vm940, %v834, %v939
    %942 = vst [vmem:[%s3] sm:$0x3] %v941
  $region17: #{unet_conv2_forward.3} parent=0 // pred_fallthru
    _
  // Predicated region
  $region18: #{unet_conv2_forward.3} parent=0 // pred_check
    _
  $region19: #{unet_conv2_forward.3} parent=0 // pred_check_branch
    %944 = sbr.rel (0) target = $region21
  $region20: #{unet_conv2_forward.3} parent=0 // pred_region
    _
  $region21: #{unet_conv2_forward.3} parent=0 // pred_fallthru
    _
  // Predicated region
  $region22: #{unet_conv2_forward.3} parent=0 // pred_check
    _
  $region23: #{unet_conv2_forward.3} parent=0 // pred_check_branch
    %946 = sbr.rel (0) target = $region25
  $region24: #{unet_conv2_forward.3} parent=0 // pred_region
    _
  $region25: #{unet_conv2_forward.3} parent=0 // pred_fallthru
    _
  // Predicated region
  $region26: #{unet_conv2_forward.3} parent=0 // pred_check
    _
  $region27: #{unet_conv2_forward.3} parent=0 // pred_check_branch
    %948 = sbr.rel (0) target = $region29
  $region28: #{unet_conv2_forward.3} parent=0 // pred_region
    _
  $region29: #{unet_conv2_forward.3} parent=0 // pred_fallthru
    _
  // Predicated region
  $region30: #{unet_conv2_forward.3} parent=0 // pred_check
    _
  $region31: #{unet_conv2_forward.3} parent=0 // pred_check_branch
    %950 = sbr.rel (0) target = $region33
  $region32: #{unet_conv2_forward.3} parent=0 // pred_region
    _
  $region33: #{unet_conv2_forward.3} parent=0 // pred_fallthru
    _

// kernel: tile.18
$region0: #{tile.18}
  #allocation0 [shape = 's32[1]{0}', space=sflag, size = 0x4, scoped, tag = 'scoped memory for tile.18']
  %s0 = inlined_call_operand.vmem [shape: f32[8], index: 0, kind: input, shape index: {}]
  %s1 = inlined_call_operand.vmem [shape: f32[9,8], index: 1, kind: output, shape index: {}]
  // Predicated region
  $region2: #{tile.18} parent=0 // pred_check
    _
  $region3: #{tile.18} parent=0 // pred_check_branch
    %3 = sbr.rel (0) target = $region5
  $region4: #{tile.18} parent=0 // pred_region
    _
  $region5: #{tile.18} parent=0 // pred_fallthru
    _
  %v4 = vld [vmem:[%s0] ss:$0 sm:$0xff]
  %5 = vst [vmem:[%s1] sm:$0xff] %v4
  %s6 = scalar_lea.vmem %s1, 8
  %7 = vst [vmem:[%s6] sm:$0xff] %v4

// kernel: tile.19
$region0: #{tile.19}
  %s0 = inlined_call_operand.vmem [shape: f32[9,8], index: 0, kind: input, shape index: {}]
  %s1 = inlined_call_operand.vmem [shape: f32[72], index: 1, kind: output, shape index: {}]
  $region1: #{tile.19} parent=0
    #allocation0 [shape = 'u8[4096]{0}', space=vmem, size = 0x1000, scoped, tag = 'scoped mem for output reshape']
    %v2 = vld [vmem:[%s0] sm:$0x1]
    %vm3 = vcmask 64512
    %4 = vst.msk [vmem:[#allocation0] sm:$0x1] %vm3, %v2
    %s5 = scalar_lea.vmem %s0, 8
    %v6 = vld [vmem:[%s5] sm:$0x1]
    %7 = vrot.lane.b32.xlu0 %v6, 64
    %v8 = vpop.permute.xlu0 %7
    %vm9 = vcmask 589312
    %10 = vst.msk [vmem:[#allocation0] sm:$0x1] %vm9, %v8
    %s11 = scalar_lea.vmem %s0, 7
    %v12 = vld [vmem:[%s11] sm:$0x1]
    %13 = vrot.lane.b32.xlu0 %v12, 56
    %v14 = vpop.permute.xlu0 %13
    %vm15 = vcmask 523712
    %16 = vst.msk [vmem:[#allocation0] sm:$0x1] %vm15, %v14
    %s17 = scalar_lea.vmem %s0, 6
    %v18 = vld [vmem:[%s17] sm:$0x1]
    %19 = vrot.lane.b32.xlu0 %v18, 48
    %v20 = vpop.permute.xlu0 %19
    %vm21 = vcmask 458112
    %22 = vst.msk [vmem:[#allocation0] sm:$0x1] %vm21, %v20
    %s23 = scalar_lea.vmem %s0, 5
    %v24 = vld [vmem:[%s23] sm:$0x1]
    %25 = vrot.lane.b32.xlu0 %v24, 40
    %v26 = vpop.permute.xlu0 %25
    %vm27 = vcmask 392512
    %28 = vst.msk [vmem:[#allocation0] sm:$0x1] %vm27, %v26
    %s29 = scalar_lea.vmem %s0, 4
    %v30 = vld [vmem:[%s29] sm:$0x1]
    %31 = vrot.lane.b32.xlu0 %v30, 32
    %v32 = vpop.permute.xlu0 %31
    %vm33 = vcmask 326912
    %34 = vst.msk [vmem:[#allocation0] sm:$0x1] %vm33, %v32
    %s35 = scalar_lea.vmem %s0, 3
    %v36 = vld [vmem:[%s35] sm:$0x1]
    %37 = vrot.lane.b32.xlu0 %v36, 24
    %v38 = vpop.permute.xlu0 %37
    %vm39 = vcmask 261312
    %40 = vst.msk [vmem:[#allocation0] sm:$0x1] %vm39, %v38
    %s41 = scalar_lea.vmem %s0, 2
    %v42 = vld [vmem:[%s41] sm:$0x1]
    %43 = vrot.lane.b32.xlu0 %v42, 16
    %v44 = vpop.permute.xlu0 %43
    %vm45 = vcmask 195712
    %46 = vst.msk [vmem:[#allocation0] sm:$0x1] %vm45, %v44
    %s47 = scalar_lea.vmem %s0, 1
    %v48 = vld [vmem:[%s47] sm:$0x1]
    %49 = vrot.lane.b32.xlu0 %v48, 8
    %v50 = vpop.permute.xlu0 %49
    %vm51 = vcmask 130112
    %52 = vst.msk [vmem:[#allocation0] sm:$0x1] %vm51, %v50
    %s54 = ssub.s32 2, 1
    %v55 = vld [vmem:[#allocation0] sm:%s54]
    %s57 = ssub.s32 2, 1
    %58 = vst [vmem:[%s1] sm:%s57] %v55

// kernel: unet_conv2_forward.5
$region0: #{unet_conv2_forward.5}
  #allocation0 [shape = 'u32[]', space=smem, size = 0x4, offset = 0x4, fixed_abs, tag = 'smem constant byte address 0x4 - core index']
  #allocation1 [shape = 'u32[72,128]{1,0:T(1,128)}', space=vmem, size = 0x9000, scoped, tag = 'internal scratch']
  %s0 = inlined_call_operand.vmem [shape: bf16[288,128], index: 0, kind: input, shape index: {}]
  %s1 = inlined_call_operand.vmem [shape: f32[1,128], index: 1, kind: input, shape index: {}]
  %s2 = inlined_call_operand.vmem [shape: f32[1,128], index: 2, kind: input, shape index: {}]
  %s3 = inlined_call_operand.vmem [shape: f32[288,128], index: 3, kind: output, shape index: {}]
  %s4 = sld [smem:[#allocation0]]
  $region22: #{unet_conv2_forward.5} parent=0
    _
  %s6 = ssub.s32 1, %s4
  %s7 = scalar_select 0, %s6, %s4
  // Predicated region
  $region2: #{unet_conv2_forward.5} parent=0 // pred_check
    _
  $region3: #{unet_conv2_forward.5} parent=0 // pred_check_branch
    %9 = sbr.rel (0) target = $region5
  $region4: #{unet_conv2_forward.5} parent=0 // pred_region
    _
  $region5: #{unet_conv2_forward.5} parent=0 // pred_fallthru
    _
  // Predicated region
  $region6: #{unet_conv2_forward.5} parent=0 // pred_check
    _
  $region7: #{unet_conv2_forward.5} parent=0 // pred_check_branch
    %11 = sbr.rel (0) target = $region9
  $region8: #{unet_conv2_forward.5} parent=0 // pred_region
    _
  $region9: #{unet_conv2_forward.5} parent=0 // pred_fallthru
    _
  // Predicated region
  $region10: #{unet_conv2_forward.5} parent=0 // pred_check
    _
  $region11: #{unet_conv2_forward.5} parent=0 // pred_check_branch
    %13 = sbr.rel (0) target = $region13
  $region12: #{unet_conv2_forward.5} parent=0 // pred_region
    _
  $region13: #{unet_conv2_forward.5} parent=0 // pred_fallthru
    _
  %v14 = vld [vmem:[%s0] sm:$0xf]
  %v15 = vld [vmem:[%s0 + $0x4] sm:$0xf]
  %v16 = vld [vmem:[%s0 + $0x8] sm:$0xf]
  %v17 = vld [vmem:[%s0 + $0xc] sm:$0xf]
  %v18 = vld [vmem:[%s0 + $0x10] sm:$0xf]
  %v19 = vld [vmem:[%s0 + $0x14] sm:$0xf]
  %v20 = vld [vmem:[%s0 + $0x18] sm:$0xf]
  %v21 = vld [vmem:[%s0 + $0x1c] sm:$0xf]
  %v22 = vld [vmem:[%s0 + $0x20] sm:$0xf]
  %v23 = vld [vmem:[%s0 + $0x24] sm:$0xf]
  %v24 = vld [vmem:[%s0 + $0x28] sm:$0xf]
  %v25 = vld [vmem:[%s0 + $0x2c] sm:$0xf]
  %v26 = vld [vmem:[%s0 + $0x30] sm:$0xf]
  %v27 = vld [vmem:[%s0 + $0x34] sm:$0xf]
  %v28 = vld [vmem:[%s0 + $0x38] sm:$0xf]
  %v29 = vld [vmem:[%s0 + $0x3c] sm:$0xf]
  %v30 = vld [vmem:[%s0 + $0x40] sm:$0xf]
  %v31 = vld [vmem:[%s0 + $0x44] sm:$0xf]
  %v32 = vld [vmem:[%s0 + $0x48] sm:$0xf]
  %v33 = vld [vmem:[%s0 + $0x4c] sm:$0xf]
  %v34 = vld [vmem:[%s0 + $0x50] sm:$0xf]
  %v35 = vld [vmem:[%s0 + $0x54] sm:$0xf]
  %v36 = vld [vmem:[%s0 + $0x58] sm:$0xf]
  %v37 = vld [vmem:[%s0 + $0x5c] sm:$0xf]
  %v38 = vld [vmem:[%s0 + $0x60] sm:$0xf]
  %v39 = vld [vmem:[%s0 + $0x64] sm:$0xf]
  %v40 = vld [vmem:[%s0 + $0x68] sm:$0xf]
  %v41 = vld [vmem:[%s0 + $0x6c] sm:$0xf]
  %v42 = vld [vmem:[%s0 + $0x70] sm:$0xf]
  %v43 = vld [vmem:[%s0 + $0x74] sm:$0xf]
  %v44 = vld [vmem:[%s0 + $0x78] sm:$0xf]
  %v45 = vld [vmem:[%s0 + $0x7c] sm:$0xf]
  %v46 = vld [vmem:[%s0 + $0x80] sm:$0xf]
  %v47 = vld [vmem:[%s0 + $0x84] sm:$0xf]
  %v48 = vld [vmem:[%s0 + $0x88] sm:$0xf]
  %v49 = vld [vmem:[%s0 + $0x8c] sm:$0xf]
  %v50 = vunpack.c.l.bf16 %v14
  %v51 = vunpack.c.l.bf16 %v15
  %v52 = vunpack.c.l.bf16 %v16
  %v53 = vunpack.c.l.bf16 %v17
  %v54 = vunpack.c.l.bf16 %v18
  %v55 = vunpack.c.l.bf16 %v19
  %v56 = vunpack.c.l.bf16 %v20
  %v57 = vunpack.c.l.bf16 %v21
  %v58 = vunpack.c.l.bf16 %v22
  %v59 = vunpack.c.l.bf16 %v23
  %v60 = vunpack.c.l.bf16 %v24
  %v61 = vunpack.c.l.bf16 %v25
  %v62 = vunpack.c.l.bf16 %v26
  %v63 = vunpack.c.l.bf16 %v27
  %v64 = vunpack.c.l.bf16 %v28
  %v65 = vunpack.c.l.bf16 %v29
  %v66 = vunpack.c.l.bf16 %v30
  %v67 = vunpack.c.l.bf16 %v31
  %v68 = vunpack.c.l.bf16 %v32
  %v69 = vunpack.c.l.bf16 %v33
  %v70 = vunpack.c.l.bf16 %v34
  %v71 = vunpack.c.l.bf16 %v35
  %v72 = vunpack.c.l.bf16 %v36
  %v73 = vunpack.c.l.bf16 %v37
  %v74 = vunpack.c.l.bf16 %v38
  %v75 = vunpack.c.l.bf16 %v39
  %v76 = vunpack.c.l.bf16 %v40
  %v77 = vunpack.c.l.bf16 %v41
  %v78 = vunpack.c.l.bf16 %v42
  %v79 = vunpack.c.l.bf16 %v43
  %v80 = vunpack.c.l.bf16 %v44
  %v81 = vunpack.c.l.bf16 %v45
  %v82 = vunpack.c.l.bf16 %v46
  %v83 = vunpack.c.l.bf16 %v47
  %v84 = vunpack.c.l.bf16 %v48
  %v85 = vunpack.c.l.bf16 %v49
  %v86 = vld [vmem:[%s1] sm:$0x1]
  %v88 = vperm.slane %v86, 0
  %v90 = vmul.f32 %v50, %v88
  %v91 = vmul.f32 %v51, %v88
  %v92 = vmul.f32 %v52, %v88
  %v93 = vmul.f32 %v53, %v88
  %v94 = vmul.f32 %v54, %v88
  %v95 = vmul.f32 %v55, %v88
  %v96 = vmul.f32 %v56, %v88
  %v97 = vmul.f32 %v57, %v88
  %v98 = vmul.f32 %v58, %v88
  %v99 = vmul.f32 %v59, %v88
  %v100 = vmul.f32 %v60, %v88
  %v101 = vmul.f32 %v61, %v88
  %v102 = vmul.f32 %v62, %v88
  %v103 = vmul.f32 %v63, %v88
  %v104 = vmul.f32 %v64, %v88
  %v105 = vmul.f32 %v65, %v88
  %v106 = vmul.f32 %v66, %v88
  %v107 = vmul.f32 %v67, %v88
  %v108 = vmul.f32 %v68, %v88
  %v109 = vmul.f32 %v69, %v88
  %v110 = vmul.f32 %v70, %v88
  %v111 = vmul.f32 %v71, %v88
  %v112 = vmul.f32 %v72, %v88
  %v113 = vmul.f32 %v73, %v88
  %v114 = vmul.f32 %v74, %v88
  %v115 = vmul.f32 %v75, %v88
  %v116 = vmul.f32 %v76, %v88
  %v117 = vmul.f32 %v77, %v88
  %v118 = vmul.f32 %v78, %v88
  %v119 = vmul.f32 %v79, %v88
  %v120 = vmul.f32 %v80, %v88
  %v121 = vmul.f32 %v81, %v88
  %v122 = vmul.f32 %v82, %v88
  %v123 = vmul.f32 %v83, %v88
  %v124 = vmul.f32 %v84, %v88
  %v125 = vmul.f32 %v85, %v88
  %v126 = vld [vmem:[%s2] sm:$0x1]
  %v128 = vperm.slane %v126, 0
  %v130 = vadd.f32 %v90, %v128
  %v131 = vadd.f32 %v91, %v128
  %v132 = vadd.f32 %v92, %v128
  %v133 = vadd.f32 %v93, %v128
  %v134 = vadd.f32 %v94, %v128
  %v135 = vadd.f32 %v95, %v128
  %v136 = vadd.f32 %v96, %v128
  %v137 = vadd.f32 %v97, %v128
  %v138 = vadd.f32 %v98, %v128
  %v139 = vadd.f32 %v99, %v128
  %v140 = vadd.f32 %v100, %v128
  %v141 = vadd.f32 %v101, %v128
  %v142 = vadd.f32 %v102, %v128
  %v143 = vadd.f32 %v103, %v128
  %v144 = vadd.f32 %v104, %v128
  %v145 = vadd.f32 %v105, %v128
  %v146 = vadd.f32 %v106, %v128
  %v147 = vadd.f32 %v107, %v128
  %v148 = vadd.f32 %v108, %v128
  %v149 = vadd.f32 %v109, %v128
  %v150 = vadd.f32 %v110, %v128
  %v151 = vadd.f32 %v111, %v128
  %v152 = vadd.f32 %v112, %v128
  %v153 = vadd.f32 %v113, %v128
  %v154 = vadd.f32 %v114, %v128
  %v155 = vadd.f32 %v115, %v128
  %v156 = vadd.f32 %v116, %v128
  %v157 = vadd.f32 %v117, %v128
  %v158 = vadd.f32 %v118, %v128
  %v159 = vadd.f32 %v119, %v128
  %v160 = vadd.f32 %v120, %v128
  %v161 = vadd.f32 %v121, %v128
  %v162 = vadd.f32 %v122, %v128
  %v163 = vadd.f32 %v123, %v128
  %v164 = vadd.f32 %v124, %v128
  %v165 = vadd.f32 %v125, %v128
  %v166 = vmax.f32 %v130, 0.0
  %v167 = vmax.f32 %v131, 0.0
  %v168 = vmax.f32 %v132, 0.0
  %v169 = vmax.f32 %v133, 0.0
  %v170 = vmax.f32 %v134, 0.0
  %v171 = vmax.f32 %v135, 0.0
  %v172 = vmax.f32 %v136, 0.0
  %v173 = vmax.f32 %v137, 0.0
  %v174 = vmax.f32 %v138, 0.0
  %v175 = vmax.f32 %v139, 0.0
  %v176 = vmax.f32 %v140, 0.0
  %v177 = vmax.f32 %v141, 0.0
  %v178 = vmax.f32 %v142, 0.0
  %v179 = vmax.f32 %v143, 0.0
  %v180 = vmax.f32 %v144, 0.0
  %v181 = vmax.f32 %v145, 0.0
  %v182 = vmax.f32 %v146, 0.0
  %v183 = vmax.f32 %v147, 0.0
  %v184 = vmax.f32 %v148, 0.0
  %v185 = vmax.f32 %v149, 0.0
  %v186 = vmax.f32 %v150, 0.0
  %v187 = vmax.f32 %v151, 0.0
  %v188 = vmax.f32 %v152, 0.0
  %v189 = vmax.f32 %v153, 0.0
  %v190 = vmax.f32 %v154, 0.0
  %v191 = vmax.f32 %v155, 0.0
  %v192 = vmax.f32 %v156, 0.0
  %v193 = vmax.f32 %v157, 0.0
  %v194 = vmax.f32 %v158, 0.0
  %v195 = vmax.f32 %v159, 0.0
  %v196 = vmax.f32 %v160, 0.0
  %v197 = vmax.f32 %v161, 0.0
  %v198 = vmax.f32 %v162, 0.0
  %v199 = vmax.f32 %v163, 0.0
  %v200 = vmax.f32 %v164, 0.0
  %v201 = vmax.f32 %v165, 0.0
  %202 = vst [vmem:[%s3] sm:$0xff] %v166
  %203 = vst [vmem:[%s3 + $0x8] sm:$0xff] %v167
  %204 = vst [vmem:[%s3 + $0x10] sm:$0xff] %v168
  %205 = vst [vmem:[%s3 + $0x18] sm:$0xff] %v169
  %206 = vst [vmem:[%s3 + $0x20] sm:$0xff] %v170
  %207 = vst [vmem:[%s3 + $0x28] sm:$0xff] %v171
  %208 = vst [vmem:[%s3 + $0x30] sm:$0xff] %v172
  %209 = vst [vmem:[%s3 + $0x38] sm:$0xff] %v173
  %210 = vst [vmem:[%s3 + $0x40] sm:$0xff] %v174
  %211 = vst [vmem:[%s3 + $0x48] sm:$0xff] %v175
  %212 = vst [vmem:[%s3 + $0x50] sm:$0xff] %v176
  %213 = vst [vmem:[%s3 + $0x58] sm:$0xff] %v177
  %214 = vst [vmem:[%s3 + $0x60] sm:$0xff] %v178
  %215 = vst [vmem:[%s3 + $0x68] sm:$0xff] %v179
  %216 = vst [vmem:[%s3 + $0x70] sm:$0xff] %v180
  %217 = vst [vmem:[%s3 + $0x78] sm:$0xff] %v181
  %218 = vst [vmem:[%s3 + $0x80] sm:$0xff] %v182
  %219 = vst [vmem:[%s3 + $0x88] sm:$0xff] %v183
  %220 = vst [vmem:[%s3 + $0x90] sm:$0xff] %v184
  %221 = vst [vmem:[%s3 + $0x98] sm:$0xff] %v185
  %222 = vst [vmem:[%s3 + $0xa0] sm:$0xff] %v186
  %223 = vst [vmem:[%s3 + $0xa8] sm:$0xff] %v187
  %224 = vst [vmem:[%s3 + $0xb0] sm:$0xff] %v188
  %225 = vst [vmem:[%s3 + $0xb8] sm:$0xff] %v189
  %226 = vst [vmem:[%s3 + $0xc0] sm:$0xff] %v190
  %227 = vst [vmem:[%s3 + $0xc8] sm:$0xff] %v191
  %228 = vst [vmem:[%s3 + $0xd0] sm:$0xff] %v192
  %229 = vst [vmem:[%s3 + $0xd8] sm:$0xff] %v193
  %230 = vst [vmem:[%s3 + $0xe0] sm:$0xff] %v194
  %231 = vst [vmem:[%s3 + $0xe8] sm:$0xff] %v195
  %232 = vst [vmem:[%s3 + $0xf0] sm:$0xff] %v196
  %233 = vst [vmem:[%s3 + $0xf8] sm:$0xff] %v197
  %234 = vst [vmem:[%s3 + $0x100] sm:$0xff] %v198
  %235 = vst [vmem:[%s3 + $0x108] sm:$0xff] %v199
  %236 = vst [vmem:[%s3 + $0x110] sm:$0xff] %v200
  %237 = vst [vmem:[%s3 + $0x118] sm:$0xff] %v201
  // Predicated region
  $region14: #{unet_conv2_forward.5} parent=0 // pred_check
    _
  $region15: #{unet_conv2_forward.5} parent=0 // pred_check_branch
    %239 = sbr.rel (0) target = $region17
  $region16: #{unet_conv2_forward.5} parent=0 // pred_region
    _
  $region17: #{unet_conv2_forward.5} parent=0 // pred_fallthru
    _
  // Predicated region
  $region18: #{unet_conv2_forward.5} parent=0 // pred_check
    _
  $region19: #{unet_conv2_forward.5} parent=0 // pred_check_branch
    %241 = sbr.rel (0) target = $region21
  $region20: #{unet_conv2_forward.5} parent=0 // pred_region
    _
  $region21: #{unet_conv2_forward.5} parent=0 // pred_fallthru
    _

// kernel: unet_conv2_forward.4
$region0: #{unet_conv2_forward.4}
  #allocation0 [shape = 'u32[]', space=smem, size = 0x4, offset = 0x4, fixed_abs, tag = 'smem constant byte address 0x4 - core index']
  #allocation1 [shape = 'u32[72,128]{1,0:T(1,128)}', space=vmem, size = 0x9000, scoped, tag = 'internal scratch']
  #allocation2 [shape = 'f32[288,128]{1,0:T(8,128)}', space=vmem, size = 0x24000, scoped, tag = 'scratch operand']
  %s0 = inlined_call_operand.vmem [shape: bf16[288,80], index: 0, kind: input, shape index: {}]
  %s1 = inlined_call_operand.vmem [shape: bf16[80,128], index: 1, kind: input, shape index: {}]
  %s2 = inlined_call_operand.vmem [shape: f32[1,80], index: 2, kind: input, shape index: {}]
  %s3 = inlined_call_operand.vmem [shape: f32[1,80], index: 3, kind: input, shape index: {}]
  %s4 = inlined_call_operand.vmem [shape: bf16[288,128], index: 4, kind: output, shape index: {0}]
  %s5 = inlined_call_operand.vmem [shape: f32[1,2,128], index: 5, kind: output, shape index: {1}]
  %6 = xla_tuple %s4, %s5
  %s7 = sld [smem:[#allocation0]]
  $region42: #{unet_conv2_forward.4} parent=0
    _
  %s9 = ssub.s32 1, %s7
  %s10 = scalar_select 0, %s9, %s7
  // Predicated region
  $region2: #{unet_conv2_forward.4} parent=0 // pred_check
    _
  $region3: #{unet_conv2_forward.4} parent=0 // pred_check_branch
    %12 = sbr.rel (0) target = $region5
  $region4: #{unet_conv2_forward.4} parent=0 // pred_region
    _
  $region5: #{unet_conv2_forward.4} parent=0 // pred_fallthru
    _
  // Predicated region
  $region6: #{unet_conv2_forward.4} parent=0 // pred_check
    _
  $region7: #{unet_conv2_forward.4} parent=0 // pred_check_branch
    %14 = sbr.rel (0) target = $region9
  $region8: #{unet_conv2_forward.4} parent=0 // pred_region
    _
  $region9: #{unet_conv2_forward.4} parent=0 // pred_fallthru
    _
  // Predicated region
  $region10: #{unet_conv2_forward.4} parent=0 // pred_check
    _
  $region11: #{unet_conv2_forward.4} parent=0 // pred_check_branch
    %16 = sbr.rel (0) target = $region13
  $region12: #{unet_conv2_forward.4} parent=0 // pred_region
    _
  $region13: #{unet_conv2_forward.4} parent=0 // pred_fallthru
    _
  // Predicated region
  $region14: #{unet_conv2_forward.4} parent=0 // pred_check
    _
  $region15: #{unet_conv2_forward.4} parent=0 // pred_check_branch
    %18 = sbr.rel (0) target = $region17
  $region16: #{unet_conv2_forward.4} parent=0 // pred_region
    _
  $region17: #{unet_conv2_forward.4} parent=0 // pred_fallthru
    _
  %p20 = scmp.eq.s32.totalorder 0, 0
  // Predicated region
  $region18: #{unet_conv2_forward.4} parent=0 // pred_check
    %p21 = pneg %p20
  $region19: #{unet_conv2_forward.4} parent=0 // pred_check_branch
    %23 = sbr.rel (%p21) target = $region21
  $region20: #{unet_conv2_forward.4} parent=0 // pred_region
    %24 = vst [vmem:[#allocation2] sm:$0xff] 0.0
    %25 = vst [vmem:[#allocation2 + $0x8] sm:$0xff] 0.0
    %26 = vst [vmem:[#allocation2 + $0x10] sm:$0xff] 0.0
    %27 = vst [vmem:[#allocation2 + $0x18] sm:$0xff] 0.0
    %28 = vst [vmem:[#allocation2 + $0x20] sm:$0xff] 0.0
    %29 = vst [vmem:[#allocation2 + $0x28] sm:$0xff] 0.0
    %30 = vst [vmem:[#allocation2 + $0x30] sm:$0xff] 0.0
    %31 = vst [vmem:[#allocation2 + $0x38] sm:$0xff] 0.0
    %32 = vst [vmem:[#allocation2 + $0x40] sm:$0xff] 0.0
    %33 = vst [vmem:[#allocation2 + $0x48] sm:$0xff] 0.0
    %34 = vst [vmem:[#allocation2 + $0x50] sm:$0xff] 0.0
    %35 = vst [vmem:[#allocation2 + $0x58] sm:$0xff] 0.0
    %36 = vst [vmem:[#allocation2 + $0x60] sm:$0xff] 0.0
    %37 = vst [vmem:[#allocation2 + $0x68] sm:$0xff] 0.0
    %38 = vst [vmem:[#allocation2 + $0x70] sm:$0xff] 0.0
    %39 = vst [vmem:[#allocation2 + $0x78] sm:$0xff] 0.0
    %40 = vst [vmem:[#allocation2 + $0x80] sm:$0xff] 0.0
    %41 = vst [vmem:[#allocation2 + $0x88] sm:$0xff] 0.0
    %42 = vst [vmem:[#allocation2 + $0x90] sm:$0xff] 0.0
    %43 = vst [vmem:[#allocation2 + $0x98] sm:$0xff] 0.0
    %44 = vst [vmem:[#allocation2 + $0xa0] sm:$0xff] 0.0
    %45 = vst [vmem:[#allocation2 + $0xa8] sm:$0xff] 0.0
    %46 = vst [vmem:[#allocation2 + $0xb0] sm:$0xff] 0.0
    %47 = vst [vmem:[#allocation2 + $0xb8] sm:$0xff] 0.0
    %48 = vst [vmem:[#allocation2 + $0xc0] sm:$0xff] 0.0
    %49 = vst [vmem:[#allocation2 + $0xc8] sm:$0xff] 0.0
    %50 = vst [vmem:[#allocation2 + $0xd0] sm:$0xff] 0.0
    %51 = vst [vmem:[#allocation2 + $0xd8] sm:$0xff] 0.0
    %52 = vst [vmem:[#allocation2 + $0xe0] sm:$0xff] 0.0
    %53 = vst [vmem:[#allocation2 + $0xe8] sm:$0xff] 0.0
    %54 = vst [vmem:[#allocation2 + $0xf0] sm:$0xff] 0.0
    %55 = vst [vmem:[#allocation2 + $0xf8] sm:$0xff] 0.0
    %56 = vst [vmem:[#allocation2 + $0x100] sm:$0xff] 0.0
    %57 = vst [vmem:[#allocation2 + $0x108] sm:$0xff] 0.0
    %58 = vst [vmem:[#allocation2 + $0x110] sm:$0xff] 0.0
    %59 = vst [vmem:[#allocation2 + $0x118] sm:$0xff] 0.0
  $region21: #{unet_conv2_forward.4} parent=0 // pred_fallthru
    _
  %v60 = vld [vmem:[%s0] sm:$0xf]
  %v61 = vld [vmem:[%s0 + $0x4] sm:$0xf]
  %v62 = vld [vmem:[%s0 + $0x8] sm:$0xf]
  %v63 = vld [vmem:[%s0 + $0xc] sm:$0xf]
  %v64 = vld [vmem:[%s0 + $0x10] sm:$0xf]
  %v65 = vld [vmem:[%s0 + $0x14] sm:$0xf]
  %v66 = vld [vmem:[%s0 + $0x18] sm:$0xf]
  %v67 = vld [vmem:[%s0 + $0x1c] sm:$0xf]
  %v68 = vld [vmem:[%s0 + $0x20] sm:$0xf]
  %v69 = vld [vmem:[%s0 + $0x24] sm:$0xf]
  %v70 = vld [vmem:[%s0 + $0x28] sm:$0xf]
  %v71 = vld [vmem:[%s0 + $0x2c] sm:$0xf]
  %v72 = vld [vmem:[%s0 + $0x30] sm:$0xf]
  %v73 = vld [vmem:[%s0 + $0x34] sm:$0xf]
  %v74 = vld [vmem:[%s0 + $0x38] sm:$0xf]
  %v75 = vld [vmem:[%s0 + $0x3c] sm:$0xf]
  %v76 = vld [vmem:[%s0 + $0x40] sm:$0xf]
  %v77 = vld [vmem:[%s0 + $0x44] sm:$0xf]
  %v78 = vld [vmem:[%s0 + $0x48] sm:$0xf]
  %v79 = vld [vmem:[%s0 + $0x4c] sm:$0xf]
  %v80 = vld [vmem:[%s0 + $0x50] sm:$0xf]
  %v81 = vld [vmem:[%s0 + $0x54] sm:$0xf]
  %v82 = vld [vmem:[%s0 + $0x58] sm:$0xf]
  %v83 = vld [vmem:[%s0 + $0x5c] sm:$0xf]
  %v84 = vld [vmem:[%s0 + $0x60] sm:$0xf]
  %v85 = vld [vmem:[%s0 + $0x64] sm:$0xf]
  %v86 = vld [vmem:[%s0 + $0x68] sm:$0xf]
  %v87 = vld [vmem:[%s0 + $0x6c] sm:$0xf]
  %v88 = vld [vmem:[%s0 + $0x70] sm:$0xf]
  %v89 = vld [vmem:[%s0 + $0x74] sm:$0xf]
  %v90 = vld [vmem:[%s0 + $0x78] sm:$0xf]
  %v91 = vld [vmem:[%s0 + $0x7c] sm:$0xf]
  %v92 = vld [vmem:[%s0 + $0x80] sm:$0xf]
  %v93 = vld [vmem:[%s0 + $0x84] sm:$0xf]
  %v94 = vld [vmem:[%s0 + $0x88] sm:$0xf]
  %v95 = vld [vmem:[%s0 + $0x8c] sm:$0xf]
  %v96 = vunpack.c.l.bf16 %v60
  %v97 = vunpack.c.l.bf16 %v61
  %v98 = vunpack.c.l.bf16 %v62
  %v99 = vunpack.c.l.bf16 %v63
  %v100 = vunpack.c.l.bf16 %v64
  %v101 = vunpack.c.l.bf16 %v65
  %v102 = vunpack.c.l.bf16 %v66
  %v103 = vunpack.c.l.bf16 %v67
  %v104 = vunpack.c.l.bf16 %v68
  %v105 = vunpack.c.l.bf16 %v69
  %v106 = vunpack.c.l.bf16 %v70
  %v107 = vunpack.c.l.bf16 %v71
  %v108 = vunpack.c.l.bf16 %v72
  %v109 = vunpack.c.l.bf16 %v73
  %v110 = vunpack.c.l.bf16 %v74
  %v111 = vunpack.c.l.bf16 %v75
  %v112 = vunpack.c.l.bf16 %v76
  %v113 = vunpack.c.l.bf16 %v77
  %v114 = vunpack.c.l.bf16 %v78
  %v115 = vunpack.c.l.bf16 %v79
  %v116 = vunpack.c.l.bf16 %v80
  %v117 = vunpack.c.l.bf16 %v81
  %v118 = vunpack.c.l.bf16 %v82
  %v119 = vunpack.c.l.bf16 %v83
  %v120 = vunpack.c.l.bf16 %v84
  %v121 = vunpack.c.l.bf16 %v85
  %v122 = vunpack.c.l.bf16 %v86
  %v123 = vunpack.c.l.bf16 %v87
  %v124 = vunpack.c.l.bf16 %v88
  %v125 = vunpack.c.l.bf16 %v89
  %v126 = vunpack.c.l.bf16 %v90
  %v127 = vunpack.c.l.bf16 %v91
  %v128 = vunpack.c.l.bf16 %v92
  %v129 = vunpack.c.l.bf16 %v93
  %v130 = vunpack.c.l.bf16 %v94
  %v131 = vunpack.c.l.bf16 %v95
  %v132 = vld [vmem:[%s2] sm:$0x1]
  %v134 = vperm.slane %v132, 0
  %v136 = vmul.f32 %v96, %v134
  %v137 = vmul.f32 %v97, %v134
  %v138 = vmul.f32 %v98, %v134
  %v139 = vmul.f32 %v99, %v134
  %v140 = vmul.f32 %v100, %v134
  %v141 = vmul.f32 %v101, %v134
  %v142 = vmul.f32 %v102, %v134
  %v143 = vmul.f32 %v103, %v134
  %v144 = vmul.f32 %v104, %v134
  %v145 = vmul.f32 %v105, %v134
  %v146 = vmul.f32 %v106, %v134
  %v147 = vmul.f32 %v107, %v134
  %v148 = vmul.f32 %v108, %v134
  %v149 = vmul.f32 %v109, %v134
  %v150 = vmul.f32 %v110, %v134
  %v151 = vmul.f32 %v111, %v134
  %v152 = vmul.f32 %v112, %v134
  %v153 = vmul.f32 %v113, %v134
  %v154 = vmul.f32 %v114, %v134
  %v155 = vmul.f32 %v115, %v134
  %v156 = vmul.f32 %v116, %v134
  %v157 = vmul.f32 %v117, %v134
  %v158 = vmul.f32 %v118, %v134
  %v159 = vmul.f32 %v119, %v134
  %v160 = vmul.f32 %v120, %v134
  %v161 = vmul.f32 %v121, %v134
  %v162 = vmul.f32 %v122, %v134
  %v163 = vmul.f32 %v123, %v134
  %v164 = vmul.f32 %v124, %v134
  %v165 = vmul.f32 %v125, %v134
  %v166 = vmul.f32 %v126, %v134
  %v167 = vmul.f32 %v127, %v134
  %v168 = vmul.f32 %v128, %v134
  %v169 = vmul.f32 %v129, %v134
  %v170 = vmul.f32 %v130, %v134
  %v171 = vmul.f32 %v131, %v134
  %v172 = vld [vmem:[%s3] sm:$0x1]
  %v174 = vperm.slane %v172, 0
  %v176 = vadd.f32 %v136, %v174
  %v177 = vadd.f32 %v137, %v174
  %v178 = vadd.f32 %v138, %v174
  %v179 = vadd.f32 %v139, %v174
  %v180 = vadd.f32 %v140, %v174
  %v181 = vadd.f32 %v141, %v174
  %v182 = vadd.f32 %v142, %v174
  %v183 = vadd.f32 %v143, %v174
  %v184 = vadd.f32 %v144, %v174
  %v185 = vadd.f32 %v145, %v174
  %v186 = vadd.f32 %v146, %v174
  %v187 = vadd.f32 %v147, %v174
  %v188 = vadd.f32 %v148, %v174
  %v189 = vadd.f32 %v149, %v174
  %v190 = vadd.f32 %v150, %v174
  %v191 = vadd.f32 %v151, %v174
  %v192 = vadd.f32 %v152, %v174
  %v193 = vadd.f32 %v153, %v174
  %v194 = vadd.f32 %v154, %v174
  %v195 = vadd.f32 %v155, %v174
  %v196 = vadd.f32 %v156, %v174
  %v197 = vadd.f32 %v157, %v174
  %v198 = vadd.f32 %v158, %v174
  %v199 = vadd.f32 %v159, %v174
  %v200 = vadd.f32 %v160, %v174
  %v201 = vadd.f32 %v161, %v174
  %v202 = vadd.f32 %v162, %v174
  %v203 = vadd.f32 %v163, %v174
  %v204 = vadd.f32 %v164, %v174
  %v205 = vadd.f32 %v165, %v174
  %v206 = vadd.f32 %v166, %v174
  %v207 = vadd.f32 %v167, %v174
  %v208 = vadd.f32 %v168, %v174
  %v209 = vadd.f32 %v169, %v174
  %v210 = vadd.f32 %v170, %v174
  %v211 = vadd.f32 %v171, %v174
  %v212 = vmax.f32 %v176, 0.0
  %v213 = vmax.f32 %v177, 0.0
  %v214 = vmax.f32 %v178, 0.0
  %v215 = vmax.f32 %v179, 0.0
  %v216 = vmax.f32 %v180, 0.0
  %v217 = vmax.f32 %v181, 0.0
  %v218 = vmax.f32 %v182, 0.0
  %v219 = vmax.f32 %v183, 0.0
  %v220 = vmax.f32 %v184, 0.0
  %v221 = vmax.f32 %v185, 0.0
  %v222 = vmax.f32 %v186, 0.0
  %v223 = vmax.f32 %v187, 0.0
  %v224 = vmax.f32 %v188, 0.0
  %v225 = vmax.f32 %v189, 0.0
  %v226 = vmax.f32 %v190, 0.0
  %v227 = vmax.f32 %v191, 0.0
  %v228 = vmax.f32 %v192, 0.0
  %v229 = vmax.f32 %v193, 0.0
  %v230 = vmax.f32 %v194, 0.0
  %v231 = vmax.f32 %v195, 0.0
  %v232 = vmax.f32 %v196, 0.0
  %v233 = vmax.f32 %v197, 0.0
  %v234 = vmax.f32 %v198, 0.0
  %v235 = vmax.f32 %v199, 0.0
  %v236 = vmax.f32 %v200, 0.0
  %v237 = vmax.f32 %v201, 0.0
  %v238 = vmax.f32 %v202, 0.0
  %v239 = vmax.f32 %v203, 0.0
  %v240 = vmax.f32 %v204, 0.0
  %v241 = vmax.f32 %v205, 0.0
  %v242 = vmax.f32 %v206, 0.0
  %v243 = vmax.f32 %v207, 0.0
  %v244 = vmax.f32 %v208, 0.0
  %v245 = vmax.f32 %v209, 0.0
  %v246 = vmax.f32 %v210, 0.0
  %v247 = vmax.f32 %v211, 0.0
  %s248 = smul.u32 0, 288
  %v249 = vlaneseq
  %v250 = vshrl.u32 %v249, 7
  %v251 = vadd.s32 %v250, 8
  %v252 = vadd.s32 %v250, 16
  %v253 = vadd.s32 %v250, 24
  %v254 = vadd.s32 %v250, 32
  %v255 = vadd.s32 %v250, 40
  %v256 = vadd.s32 %v250, 48
  %v257 = vadd.s32 %v250, 56
  %v258 = vadd.s32 %v250, 64
  %v259 = vadd.s32 %v250, 72
  %v260 = vadd.s32 %v250, 80
  %v261 = vadd.s32 %v250, 88
  %v262 = vadd.s32 %v250, 96
  %v263 = vadd.s32 %v250, 104
  %v264 = vadd.s32 %v250, 112
  %v265 = vadd.s32 %v250, 120
  %v266 = vadd.s32 %v250, 128
  %v267 = vadd.s32 %v250, 136
  %v268 = vadd.s32 %v250, 144
  %v269 = vadd.s32 %v250, 152
  %v270 = vadd.s32 %v250, 160
  %v271 = vadd.s32 %v250, 168
  %v272 = vadd.s32 %v250, 176
  %v273 = vadd.s32 %v250, 184
  %v274 = vadd.s32 %v250, 192
  %v275 = vadd.s32 %v250, 200
  %v276 = vadd.s32 %v250, 208
  %v277 = vadd.s32 %v250, 216
  %v278 = vadd.s32 %v250, 224
  %v279 = vadd.s32 %v250, 232
  %v280 = vadd.s32 %v250, 240
  %v281 = vadd.s32 %v250, 248
  %v282 = vadd.s32 %v250, 256
  %v283 = vadd.s32 %v250, 264
  %v284 = vadd.s32 %v250, 272
  %v285 = vadd.s32 %v250, 280
  %v286 = vstv %s248
  %v287 = vadd.s32 %v286, %v250
  %v288 = vadd.s32 %v286, %v251
  %v289 = vadd.s32 %v286, %v252
  %v290 = vadd.s32 %v286, %v253
  %v291 = vadd.s32 %v286, %v254
  %v292 = vadd.s32 %v286, %v255
  %v293 = vadd.s32 %v286, %v256
  %v294 = vadd.s32 %v286, %v257
  %v295 = vadd.s32 %v286, %v258
  %v296 = vadd.s32 %v286, %v259
  %v297 = vadd.s32 %v286, %v260
  %v298 = vadd.s32 %v286, %v261
  %v299 = vadd.s32 %v286, %v262
  %v300 = vadd.s32 %v286, %v263
  %v301 = vadd.s32 %v286, %v264
  %v302 = vadd.s32 %v286, %v265
  %v303 = vadd.s32 %v286, %v266
  %v304 = vadd.s32 %v286, %v267
  %v305 = vadd.s32 %v286, %v268
  %v306 = vadd.s32 %v286, %v269
  %v307 = vadd.s32 %v286, %v270
  %v308 = vadd.s32 %v286, %v271
  %v309 = vadd.s32 %v286, %v272
  %v310 = vadd.s32 %v286, %v273
  %v311 = vadd.s32 %v286, %v274
  %v312 = vadd.s32 %v286, %v275
  %v313 = vadd.s32 %v286, %v276
  %v314 = vadd.s32 %v286, %v277
  %v315 = vadd.s32 %v286, %v278
  %v316 = vadd.s32 %v286, %v279
  %v317 = vadd.s32 %v286, %v280
  %v318 = vadd.s32 %v286, %v281
  %v319 = vadd.s32 %v286, %v282
  %v320 = vadd.s32 %v286, %v283
  %v321 = vadd.s32 %v286, %v284
  %v322 = vadd.s32 %v286, %v285
  %vm323 = vcmp.lt.s32.totalorder %v287, 288
  %vm324 = vcmp.lt.s32.totalorder %v288, 288
  %vm325 = vcmp.lt.s32.totalorder %v289, 288
  %vm326 = vcmp.lt.s32.totalorder %v290, 288
  %vm327 = vcmp.lt.s32.totalorder %v291, 288
  %vm328 = vcmp.lt.s32.totalorder %v292, 288
  %vm329 = vcmp.lt.s32.totalorder %v293, 288
  %vm330 = vcmp.lt.s32.totalorder %v294, 288
  %vm331 = vcmp.lt.s32.totalorder %v295, 288
  %vm332 = vcmp.lt.s32.totalorder %v296, 288
  %vm333 = vcmp.lt.s32.totalorder %v297, 288
  %vm334 = vcmp.lt.s32.totalorder %v298, 288
  %vm335 = vcmp.lt.s32.totalorder %v299, 288
  %vm336 = vcmp.lt.s32.totalorder %v300, 288
  %vm337 = vcmp.lt.s32.totalorder %v301, 288
  %vm338 = vcmp.lt.s32.totalorder %v302, 288
  %vm339 = vcmp.lt.s32.totalorder %v303, 288
  %vm340 = vcmp.lt.s32.totalorder %v304, 288
  %vm341 = vcmp.lt.s32.totalorder %v305, 288
  %vm342 = vcmp.lt.s32.totalorder %v306, 288
  %vm343 = vcmp.lt.s32.totalorder %v307, 288
  %vm344 = vcmp.lt.s32.totalorder %v308, 288
  %vm345 = vcmp.lt.s32.totalorder %v309, 288
  %vm346 = vcmp.lt.s32.totalorder %v310, 288
  %vm347 = vcmp.lt.s32.totalorder %v311, 288
  %vm348 = vcmp.lt.s32.totalorder %v312, 288
  %vm349 = vcmp.lt.s32.totalorder %v313, 288
  %vm350 = vcmp.lt.s32.totalorder %v314, 288
  %vm351 = vcmp.lt.s32.totalorder %v315, 288
  %vm352 = vcmp.lt.s32.totalorder %v316, 288
  %vm353 = vcmp.lt.s32.totalorder %v317, 288
  %vm354 = vcmp.lt.s32.totalorder %v318, 288
  %vm355 = vcmp.lt.s32.totalorder %v319, 288
  %vm356 = vcmp.lt.s32.totalorder %v320, 288
  %vm357 = vcmp.lt.s32.totalorder %v321, 288
  %vm358 = vcmp.lt.s32.totalorder %v322, 288
  %v359 = vsel %vm323, 1, 0
  %v360 = vsel %vm324, 1, 0
  %v361 = vsel %vm325, 1, 0
  %v362 = vsel %vm326, 1, 0
  %v363 = vsel %vm327, 1, 0
  %v364 = vsel %vm328, 1, 0
  %v365 = vsel %vm329, 1, 0
  %v366 = vsel %vm330, 1, 0
  %v367 = vsel %vm331, 1, 0
  %v368 = vsel %vm332, 1, 0
  %v369 = vsel %vm333, 1, 0
  %v370 = vsel %vm334, 1, 0
  %v371 = vsel %vm335, 1, 0
  %v372 = vsel %vm336, 1, 0
  %v373 = vsel %vm337, 1, 0
  %v374 = vsel %vm338, 1, 0
  %v375 = vsel %vm339, 1, 0
  %v376 = vsel %vm340, 1, 0
  %v377 = vsel %vm341, 1, 0
  %v378 = vsel %vm342, 1, 0
  %v379 = vsel %vm343, 1, 0
  %v380 = vsel %vm344, 1, 0
  %v381 = vsel %vm345, 1, 0
  %v382 = vsel %vm346, 1, 0
  %v383 = vsel %vm347, 1, 0
  %v384 = vsel %vm348, 1, 0
  %v385 = vsel %vm349, 1, 0
  %v386 = vsel %vm350, 1, 0
  %v387 = vsel %vm351, 1, 0
  %v388 = vsel %vm352, 1, 0
  %v389 = vsel %vm353, 1, 0
  %v390 = vsel %vm354, 1, 0
  %v391 = vsel %vm355, 1, 0
  %v392 = vsel %vm356, 1, 0
  %v393 = vsel %vm357, 1, 0
  %v394 = vsel %vm358, 1, 0
  %vm395 = vcmp.eq.s32.totalorder %v359, 1
  %vm396 = vcmp.eq.s32.totalorder %v360, 1
  %vm397 = vcmp.eq.s32.totalorder %v361, 1
  %vm398 = vcmp.eq.s32.totalorder %v362, 1
  %vm399 = vcmp.eq.s32.totalorder %v363, 1
  %vm400 = vcmp.eq.s32.totalorder %v364, 1
  %vm401 = vcmp.eq.s32.totalorder %v365, 1
  %vm402 = vcmp.eq.s32.totalorder %v366, 1
  %vm403 = vcmp.eq.s32.totalorder %v367, 1
  %vm404 = vcmp.eq.s32.totalorder %v368, 1
  %vm405 = vcmp.eq.s32.totalorder %v369, 1
  %vm406 = vcmp.eq.s32.totalorder %v370, 1
  %vm407 = vcmp.eq.s32.totalorder %v371, 1
  %vm408 = vcmp.eq.s32.totalorder %v372, 1
  %vm409 = vcmp.eq.s32.totalorder %v373, 1
  %vm410 = vcmp.eq.s32.totalorder %v374, 1
  %vm411 = vcmp.eq.s32.totalorder %v375, 1
  %vm412 = vcmp.eq.s32.totalorder %v376, 1
  %vm413 = vcmp.eq.s32.totalorder %v377, 1
  %vm414 = vcmp.eq.s32.totalorder %v378, 1
  %vm415 = vcmp.eq.s32.totalorder %v379, 1
  %vm416 = vcmp.eq.s32.totalorder %v380, 1
  %vm417 = vcmp.eq.s32.totalorder %v381, 1
  %vm418 = vcmp.eq.s32.totalorder %v382, 1
  %vm419 = vcmp.eq.s32.totalorder %v383, 1
  %vm420 = vcmp.eq.s32.totalorder %v384, 1
  %vm421 = vcmp.eq.s32.totalorder %v385, 1
  %vm422 = vcmp.eq.s32.totalorder %v386, 1
  %vm423 = vcmp.eq.s32.totalorder %v387, 1
  %vm424 = vcmp.eq.s32.totalorder %v388, 1
  %vm425 = vcmp.eq.s32.totalorder %v389, 1
  %vm426 = vcmp.eq.s32.totalorder %v390, 1
  %vm427 = vcmp.eq.s32.totalorder %v391, 1
  %vm428 = vcmp.eq.s32.totalorder %v392, 1
  %vm429 = vcmp.eq.s32.totalorder %v393, 1
  %vm430 = vcmp.eq.s32.totalorder %v394, 1
  %v431 = vsel %vm395, %v212, 0.0
  %v432 = vsel %vm396, %v213, 0.0
  %v433 = vsel %vm397, %v214, 0.0
  %v434 = vsel %vm398, %v215, 0.0
  %v435 = vsel %vm399, %v216, 0.0
  %v436 = vsel %vm400, %v217, 0.0
  %v437 = vsel %vm401, %v218, 0.0
  %v438 = vsel %vm402, %v219, 0.0
  %v439 = vsel %vm403, %v220, 0.0
  %v440 = vsel %vm404, %v221, 0.0
  %v441 = vsel %vm405, %v222, 0.0
  %v442 = vsel %vm406, %v223, 0.0
  %v443 = vsel %vm407, %v224, 0.0
  %v444 = vsel %vm408, %v225, 0.0
  %v445 = vsel %vm409, %v226, 0.0
  %v446 = vsel %vm410, %v227, 0.0
  %v447 = vsel %vm411, %v228, 0.0
  %v448 = vsel %vm412, %v229, 0.0
  %v449 = vsel %vm413, %v230, 0.0
  %v450 = vsel %vm414, %v231, 0.0
  %v451 = vsel %vm415, %v232, 0.0
  %v452 = vsel %vm416, %v233, 0.0
  %v453 = vsel %vm417, %v234, 0.0
  %v454 = vsel %vm418, %v235, 0.0
  %v455 = vsel %vm419, %v236, 0.0
  %v456 = vsel %vm420, %v237, 0.0
  %v457 = vsel %vm421, %v238, 0.0
  %v458 = vsel %vm422, %v239, 0.0
  %v459 = vsel %vm423, %v240, 0.0
  %v460 = vsel %vm424, %v241, 0.0
  %v461 = vsel %vm425, %v242, 0.0
  %v462 = vsel %vm426, %v243, 0.0
  %v463 = vsel %vm427, %v244, 0.0
  %v464 = vsel %vm428, %v245, 0.0
  %v465 = vsel %vm429, %v246, 0.0
  %v466 = vsel %vm430, %v247, 0.0
  %v467 = vpack.c.bf16 %v432, %v431
  %v468 = vpack.c.bf16 %v434, %v433
  %v469 = vpack.c.bf16 %v436, %v435
  %v470 = vpack.c.bf16 %v438, %v437
  %v471 = vpack.c.bf16 %v440, %v439
  %v472 = vpack.c.bf16 %v442, %v441
  %v473 = vpack.c.bf16 %v444, %v443
  %v474 = vpack.c.bf16 %v446, %v445
  %v475 = vpack.c.bf16 %v448, %v447
  %v476 = vpack.c.bf16 %v450, %v449
  %v477 = vpack.c.bf16 %v452, %v451
  %v478 = vpack.c.bf16 %v454, %v453
  %v479 = vpack.c.bf16 %v456, %v455
  %v480 = vpack.c.bf16 %v458, %v457
  %v481 = vpack.c.bf16 %v460, %v459
  %v482 = vpack.c.bf16 %v462, %v461
  %v483 = vpack.c.bf16 %v464, %v463
  %v484 = vpack.c.bf16 %v466, %v465
  %v485 = vld [vmem:[#allocation2] sm:$0xff]
  %v486 = vld [vmem:[#allocation2 + $0x8] sm:$0xff]
  %v487 = vld [vmem:[#allocation2 + $0x10] sm:$0xff]
  %v488 = vld [vmem:[#allocation2 + $0x18] sm:$0xff]
  %v489 = vld [vmem:[#allocation2 + $0x20] sm:$0xff]
  %v490 = vld [vmem:[#allocation2 + $0x28] sm:$0xff]
  %v491 = vld [vmem:[#allocation2 + $0x30] sm:$0xff]
  %v492 = vld [vmem:[#allocation2 + $0x38] sm:$0xff]
  %v493 = vld [vmem:[#allocation2 + $0x40] sm:$0xff]
  %v494 = vld [vmem:[#allocation2 + $0x48] sm:$0xff]
  %v495 = vld [vmem:[#allocation2 + $0x50] sm:$0xff]
  %v496 = vld [vmem:[#allocation2 + $0x58] sm:$0xff]
  %v497 = vld [vmem:[#allocation2 + $0x60] sm:$0xff]
  %v498 = vld [vmem:[#allocation2 + $0x68] sm:$0xff]
  %v499 = vld [vmem:[#allocation2 + $0x70] sm:$0xff]
  %v500 = vld [vmem:[#allocation2 + $0x78] sm:$0xff]
  %v501 = vld [vmem:[#allocation2 + $0x80] sm:$0xff]
  %v502 = vld [vmem:[#allocation2 + $0x88] sm:$0xff]
  %v503 = vld [vmem:[#allocation2 + $0x90] sm:$0xff]
  %v504 = vld [vmem:[#allocation2 + $0x98] sm:$0xff]
  %v505 = vld [vmem:[#allocation2 + $0xa0] sm:$0xff]
  %v506 = vld [vmem:[#allocation2 + $0xa8] sm:$0xff]
  %v507 = vld [vmem:[#allocation2 + $0xb0] sm:$0xff]
  %v508 = vld [vmem:[#allocation2 + $0xb8] sm:$0xff]
  %v509 = vld [vmem:[#allocation2 + $0xc0] sm:$0xff]
  %v510 = vld [vmem:[#allocation2 + $0xc8] sm:$0xff]
  %v511 = vld [vmem:[#allocation2 + $0xd0] sm:$0xff]
  %v512 = vld [vmem:[#allocation2 + $0xd8] sm:$0xff]
  %v513 = vld [vmem:[#allocation2 + $0xe0] sm:$0xff]
  %v514 = vld [vmem:[#allocation2 + $0xe8] sm:$0xff]
  %v515 = vld [vmem:[#allocation2 + $0xf0] sm:$0xff]
  %v516 = vld [vmem:[#allocation2 + $0xf8] sm:$0xff]
  %v517 = vld [vmem:[#allocation2 + $0x100] sm:$0xff]
  %v518 = vld [vmem:[#allocation2 + $0x108] sm:$0xff]
  %v519 = vld [vmem:[#allocation2 + $0x110] sm:$0xff]
  %v520 = vld [vmem:[#allocation2 + $0x118] sm:$0xff]
  %v521 = vld [vmem:[%s1] sm:$0xf]
  %v522 = vld [vmem:[%s1 + $0x4] sm:$0xf]
  %v523 = vld [vmem:[%s1 + $0x8] sm:$0xf]
  %v524 = vld [vmem:[%s1 + $0xc] sm:$0xf]
  %v525 = vld [vmem:[%s1 + $0x10] sm:$0xf]
  %v526 = vld [vmem:[%s1 + $0x14] sm:$0xf]
  %v527 = vld [vmem:[%s1 + $0x18] sm:$0xf]
  %v528 = vld [vmem:[%s1 + $0x1c] sm:$0xf]
  %v529 = vld [vmem:[%s1 + $0x20] sm:$0xf]
  %v530 = vld [vmem:[%s1 + $0x24] sm:$0xf]
  %v541 = vunpack.c.l.b16 %v521
  %v542 = vunpack.c.l.b16 %v522
  %v543 = vunpack.c.l.b16 %v523
  %v544 = vunpack.c.l.b16 %v524
  %v545 = vunpack.c.l.b16 %v525
  %v546 = vunpack.c.l.b16 %v526
  %v547 = vunpack.c.l.b16 %v527
  %v548 = vunpack.c.l.b16 %v528
  %v549 = vunpack.c.l.b16 %v529
  %v550 = vunpack.c.l.b16 %v530
  %v551 = vpack.c.b16 %v542, %v541
  %v552 = vpack.c.b16 %v544, %v543
  %v553 = vpack.c.b16 %v546, %v545
  %v554 = vpack.c.b16 %v548, %v547
  %v555 = vpack.c.b16 %v550, %v549
  %vm561 = vcmask 654336
  %v563 = vsel %vm561, %v467, 0
  %v566 = vsel %vm561, %v468, 0
  %v569 = vsel %vm561, %v469, 0
  %v572 = vsel %vm561, %v470, 0
  %v575 = vsel %vm561, %v471, 0
  %v578 = vsel %vm561, %v472, 0
  %v581 = vsel %vm561, %v473, 0
  %v584 = vsel %vm561, %v474, 0
  %v587 = vsel %vm561, %v475, 0
  %v590 = vsel %vm561, %v476, 0
  %v593 = vsel %vm561, %v477, 0
  %v596 = vsel %vm561, %v478, 0
  %v599 = vsel %vm561, %v479, 0
  %v602 = vsel %vm561, %v480, 0
  %v605 = vsel %vm561, %v481, 0
  %v608 = vsel %vm561, %v482, 0
  %v611 = vsel %vm561, %v483, 0
  %v614 = vsel %vm561, %v484, 0
  %616 = vmatpush.bf16.msra.mxu0 0
  %617 = vmatpush.bf16.msra.mxu0 0
  %618 = vmatpush.bf16.msra.mxu0 0
  %619 = vmatpush.bf16.msra.mxu0 %v555
  %620 = vmatpush.bf16.msra.mxu0 %v554
  %621 = vmatpush.bf16.msra.mxu0 %v553
  %622 = vmatpush.bf16.msra.mxu0 %v552
  %623 = vmatpush.bf16.msra.mxu0 %v551
  %624 = vmatmul.bf16.gmra.mxu0 %v563
  %v625 = vpop.f32.mrf.mxu0
  %v626 = vadd.f32 0.0, %v625
  %v627 = vpop.f32.mrf.mxu0
  %v628 = vadd.f32 0.0, %v627
  %629 = vmatmul.bf16.gmra.mxu0 %v566
  %v630 = vpop.f32.mrf.mxu0
  %v631 = vadd.f32 0.0, %v630
  %v632 = vpop.f32.mrf.mxu0
  %v633 = vadd.f32 0.0, %v632
  %634 = vmatmul.bf16.gmra.mxu0 %v569
  %v635 = vpop.f32.mrf.mxu0
  %v636 = vadd.f32 0.0, %v635
  %v637 = vpop.f32.mrf.mxu0
  %v638 = vadd.f32 0.0, %v637
  %639 = vmatmul.bf16.gmra.mxu0 %v572
  %v640 = vpop.f32.mrf.mxu0
  %v641 = vadd.f32 0.0, %v640
  %v642 = vpop.f32.mrf.mxu0
  %v643 = vadd.f32 0.0, %v642
  %644 = vmatmul.bf16.gmra.mxu0 %v575
  %v645 = vpop.f32.mrf.mxu0
  %v646 = vadd.f32 0.0, %v645
  %v647 = vpop.f32.mrf.mxu0
  %v648 = vadd.f32 0.0, %v647
  %649 = vmatmul.bf16.gmra.mxu0 %v578
  %v650 = vpop.f32.mrf.mxu0
  %v651 = vadd.f32 0.0, %v650
  %v652 = vpop.f32.mrf.mxu0
  %v653 = vadd.f32 0.0, %v652
  %654 = vmatmul.bf16.gmra.mxu0 %v581
  %v655 = vpop.f32.mrf.mxu0
  %v656 = vadd.f32 0.0, %v655
  %v657 = vpop.f32.mrf.mxu0
  %v658 = vadd.f32 0.0, %v657
  %659 = vmatmul.bf16.gmra.mxu0 %v584
  %v660 = vpop.f32.mrf.mxu0
  %v661 = vadd.f32 0.0, %v660
  %v662 = vpop.f32.mrf.mxu0
  %v663 = vadd.f32 0.0, %v662
  %664 = vmatmul.bf16.gmra.mxu0 %v587
  %v665 = vpop.f32.mrf.mxu0
  %v666 = vadd.f32 0.0, %v665
  %v667 = vpop.f32.mrf.mxu0
  %v668 = vadd.f32 0.0, %v667
  %669 = vmatmul.bf16.gmra.mxu0 %v590
  %v670 = vpop.f32.mrf.mxu0
  %v671 = vadd.f32 0.0, %v670
  %v672 = vpop.f32.mrf.mxu0
  %v673 = vadd.f32 0.0, %v672
  %674 = vmatmul.bf16.gmra.mxu0 %v593
  %v675 = vpop.f32.mrf.mxu0
  %v676 = vadd.f32 0.0, %v675
  %v677 = vpop.f32.mrf.mxu0
  %v678 = vadd.f32 0.0, %v677
  %679 = vmatmul.bf16.gmra.mxu0 %v596
  %v680 = vpop.f32.mrf.mxu0
  %v681 = vadd.f32 0.0, %v680
  %v682 = vpop.f32.mrf.mxu0
  %v683 = vadd.f32 0.0, %v682
  %684 = vmatmul.bf16.gmra.mxu0 %v599
  %v685 = vpop.f32.mrf.mxu0
  %v686 = vadd.f32 0.0, %v685
  %v687 = vpop.f32.mrf.mxu0
  %v688 = vadd.f32 0.0, %v687
  %689 = vmatmul.bf16.gmra.mxu0 %v602
  %v690 = vpop.f32.mrf.mxu0
  %v691 = vadd.f32 0.0, %v690
  %v692 = vpop.f32.mrf.mxu0
  %v693 = vadd.f32 0.0, %v692
  %694 = vmatmul.bf16.gmra.mxu0 %v605
  %v695 = vpop.f32.mrf.mxu0
  %v696 = vadd.f32 0.0, %v695
  %v697 = vpop.f32.mrf.mxu0
  %v698 = vadd.f32 0.0, %v697
  %699 = vmatmul.bf16.gmra.mxu0 %v608
  %v700 = vpop.f32.mrf.mxu0
  %v701 = vadd.f32 0.0, %v700
  %v702 = vpop.f32.mrf.mxu0
  %v703 = vadd.f32 0.0, %v702
  %704 = vmatmul.bf16.gmra.mxu0 %v611
  %v705 = vpop.f32.mrf.mxu0
  %v706 = vadd.f32 0.0, %v705
  %v707 = vpop.f32.mrf.mxu0
  %v708 = vadd.f32 0.0, %v707
  %709 = vmatmul.bf16.gmra.mxu0 %v614
  %v710 = vpop.f32.mrf.mxu0
  %v711 = vadd.f32 0.0, %v710
  %v712 = vpop.f32.mrf.mxu0
  %v713 = vadd.f32 0.0, %v712
  %714 = vdwg.mxu0
  %v715 = vadd.f32 %v485, %v626
  %v716 = vadd.f32 %v486, %v628
  %v717 = vadd.f32 %v487, %v631
  %v718 = vadd.f32 %v488, %v633
  %v719 = vadd.f32 %v489, %v636
  %v720 = vadd.f32 %v490, %v638
  %v721 = vadd.f32 %v491, %v641
  %v722 = vadd.f32 %v492, %v643
  %v723 = vadd.f32 %v493, %v646
  %v724 = vadd.f32 %v494, %v648
  %v725 = vadd.f32 %v495, %v651
  %v726 = vadd.f32 %v496, %v653
  %v727 = vadd.f32 %v497, %v656
  %v728 = vadd.f32 %v498, %v658
  %v729 = vadd.f32 %v499, %v661
  %v730 = vadd.f32 %v500, %v663
  %v731 = vadd.f32 %v501, %v666
  %v732 = vadd.f32 %v502, %v668
  %v733 = vadd.f32 %v503, %v671
  %v734 = vadd.f32 %v504, %v673
  %v735 = vadd.f32 %v505, %v676
  %v736 = vadd.f32 %v506, %v678
  %v737 = vadd.f32 %v507, %v681
  %v738 = vadd.f32 %v508, %v683
  %v739 = vadd.f32 %v509, %v686
  %v740 = vadd.f32 %v510, %v688
  %v741 = vadd.f32 %v511, %v691
  %v742 = vadd.f32 %v512, %v693
  %v743 = vadd.f32 %v513, %v696
  %v744 = vadd.f32 %v514, %v698
  %v745 = vadd.f32 %v515, %v701
  %v746 = vadd.f32 %v516, %v703
  %v747 = vadd.f32 %v517, %v706
  %v748 = vadd.f32 %v518, %v708
  %v749 = vadd.f32 %v519, %v711
  %v750 = vadd.f32 %v520, %v713
  %751 = vst [vmem:[#allocation2] sm:$0xff] %v715
  %752 = vst [vmem:[#allocation2 + $0x8] sm:$0xff] %v716
  %753 = vst [vmem:[#allocation2 + $0x10] sm:$0xff] %v717
  %754 = vst [vmem:[#allocation2 + $0x18] sm:$0xff] %v718
  %755 = vst [vmem:[#allocation2 + $0x20] sm:$0xff] %v719
  %756 = vst [vmem:[#allocation2 + $0x28] sm:$0xff] %v720
  %757 = vst [vmem:[#allocation2 + $0x30] sm:$0xff] %v721
  %758 = vst [vmem:[#allocation2 + $0x38] sm:$0xff] %v722
  %759 = vst [vmem:[#allocation2 + $0x40] sm:$0xff] %v723
  %760 = vst [vmem:[#allocation2 + $0x48] sm:$0xff] %v724
  %761 = vst [vmem:[#allocation2 + $0x50] sm:$0xff] %v725
  %762 = vst [vmem:[#allocation2 + $0x58] sm:$0xff] %v726
  %763 = vst [vmem:[#allocation2 + $0x60] sm:$0xff] %v727
  %764 = vst [vmem:[#allocation2 + $0x68] sm:$0xff] %v728
  %765 = vst [vmem:[#allocation2 + $0x70] sm:$0xff] %v729
  %766 = vst [vmem:[#allocation2 + $0x78] sm:$0xff] %v730
  %767 = vst [vmem:[#allocation2 + $0x80] sm:$0xff] %v731
  %768 = vst [vmem:[#allocation2 + $0x88] sm:$0xff] %v732
  %769 = vst [vmem:[#allocation2 + $0x90] sm:$0xff] %v733
  %770 = vst [vmem:[#allocation2 + $0x98] sm:$0xff] %v734
  %771 = vst [vmem:[#allocation2 + $0xa0] sm:$0xff] %v735
  %772 = vst [vmem:[#allocation2 + $0xa8] sm:$0xff] %v736
  %773 = vst [vmem:[#allocation2 + $0xb0] sm:$0xff] %v737
  %774 = vst [vmem:[#allocation2 + $0xb8] sm:$0xff] %v738
  %775 = vst [vmem:[#allocation2 + $0xc0] sm:$0xff] %v739
  %776 = vst [vmem:[#allocation2 + $0xc8] sm:$0xff] %v740
  %777 = vst [vmem:[#allocation2 + $0xd0] sm:$0xff] %v741
  %778 = vst [vmem:[#allocation2 + $0xd8] sm:$0xff] %v742
  %779 = vst [vmem:[#allocation2 + $0xe0] sm:$0xff] %v743
  %780 = vst [vmem:[#allocation2 + $0xe8] sm:$0xff] %v744
  %781 = vst [vmem:[#allocation2 + $0xf0] sm:$0xff] %v745
  %782 = vst [vmem:[#allocation2 + $0xf8] sm:$0xff] %v746
  %783 = vst [vmem:[#allocation2 + $0x100] sm:$0xff] %v747
  %784 = vst [vmem:[#allocation2 + $0x108] sm:$0xff] %v748
  %785 = vst [vmem:[#allocation2 + $0x110] sm:$0xff] %v749
  %786 = vst [vmem:[#allocation2 + $0x118] sm:$0xff] %v750
  // Predicated region
  $region22: #{unet_conv2_forward.4} parent=0 // pred_check
    %p787 = pneg %p20
  $region23: #{unet_conv2_forward.4} parent=0 // pred_check_branch
    %789 = sbr.rel (%p787) target = $region25
  $region24: #{unet_conv2_forward.4} parent=0 // pred_region
    %v790 = vld [vmem:[#allocation2] sm:$0xff]
    %v791 = vld [vmem:[#allocation2 + $0x8] sm:$0xff]
    %v792 = vld [vmem:[#allocation2 + $0x10] sm:$0xff]
    %v793 = vld [vmem:[#allocation2 + $0x18] sm:$0xff]
    %v794 = vld [vmem:[#allocation2 + $0x20] sm:$0xff]
    %v795 = vld [vmem:[#allocation2 + $0x28] sm:$0xff]
    %v796 = vld [vmem:[#allocation2 + $0x30] sm:$0xff]
    %v797 = vld [vmem:[#allocation2 + $0x38] sm:$0xff]
    %v798 = vld [vmem:[#allocation2 + $0x40] sm:$0xff]
    %v799 = vld [vmem:[#allocation2 + $0x48] sm:$0xff]
    %v800 = vld [vmem:[#allocation2 + $0x50] sm:$0xff]
    %v801 = vld [vmem:[#allocation2 + $0x58] sm:$0xff]
    %v802 = vld [vmem:[#allocation2 + $0x60] sm:$0xff]
    %v803 = vld [vmem:[#allocation2 + $0x68] sm:$0xff]
    %v804 = vld [vmem:[#allocation2 + $0x70] sm:$0xff]
    %v805 = vld [vmem:[#allocation2 + $0x78] sm:$0xff]
    %v806 = vld [vmem:[#allocation2 + $0x80] sm:$0xff]
    %v807 = vld [vmem:[#allocation2 + $0x88] sm:$0xff]
    %v808 = vld [vmem:[#allocation2 + $0x90] sm:$0xff]
    %v809 = vld [vmem:[#allocation2 + $0x98] sm:$0xff]
    %v810 = vld [vmem:[#allocation2 + $0xa0] sm:$0xff]
    %v811 = vld [vmem:[#allocation2 + $0xa8] sm:$0xff]
    %v812 = vld [vmem:[#allocation2 + $0xb0] sm:$0xff]
    %v813 = vld [vmem:[#allocation2 + $0xb8] sm:$0xff]
    %v814 = vld [vmem:[#allocation2 + $0xc0] sm:$0xff]
    %v815 = vld [vmem:[#allocation2 + $0xc8] sm:$0xff]
    %v816 = vld [vmem:[#allocation2 + $0xd0] sm:$0xff]
    %v817 = vld [vmem:[#allocation2 + $0xd8] sm:$0xff]
    %v818 = vld [vmem:[#allocation2 + $0xe0] sm:$0xff]
    %v819 = vld [vmem:[#allocation2 + $0xe8] sm:$0xff]
    %v820 = vld [vmem:[#allocation2 + $0xf0] sm:$0xff]
    %v821 = vld [vmem:[#allocation2 + $0xf8] sm:$0xff]
    %v822 = vld [vmem:[#allocation2 + $0x100] sm:$0xff]
    %v823 = vld [vmem:[#allocation2 + $0x108] sm:$0xff]
    %v824 = vld [vmem:[#allocation2 + $0x110] sm:$0xff]
    %v825 = vld [vmem:[#allocation2 + $0x118] sm:$0xff]
    %v826 = vpack.c.bf16 %v790, %v790
    %v827 = vpack.c.bf16 %v791, %v791
    %v828 = vpack.c.bf16 %v792, %v792
    %v829 = vpack.c.bf16 %v793, %v793
    %v830 = vpack.c.bf16 %v794, %v794
    %v831 = vpack.c.bf16 %v795, %v795
    %v832 = vpack.c.bf16 %v796, %v796
    %v833 = vpack.c.bf16 %v797, %v797
    %v834 = vpack.c.bf16 %v798, %v798
    %v835 = vpack.c.bf16 %v799, %v799
    %v836 = vpack.c.bf16 %v800, %v800
    %v837 = vpack.c.bf16 %v801, %v801
    %v838 = vpack.c.bf16 %v802, %v802
    %v839 = vpack.c.bf16 %v803, %v803
    %v840 = vpack.c.bf16 %v804, %v804
    %v841 = vpack.c.bf16 %v805, %v805
    %v842 = vpack.c.bf16 %v806, %v806
    %v843 = vpack.c.bf16 %v807, %v807
    %v844 = vpack.c.bf16 %v808, %v808
    %v845 = vpack.c.bf16 %v809, %v809
    %v846 = vpack.c.bf16 %v810, %v810
    %v847 = vpack.c.bf16 %v811, %v811
    %v848 = vpack.c.bf16 %v812, %v812
    %v849 = vpack.c.bf16 %v813, %v813
    %v850 = vpack.c.bf16 %v814, %v814
    %v851 = vpack.c.bf16 %v815, %v815
    %v852 = vpack.c.bf16 %v816, %v816
    %v853 = vpack.c.bf16 %v817, %v817
    %v854 = vpack.c.bf16 %v818, %v818
    %v855 = vpack.c.bf16 %v819, %v819
    %v856 = vpack.c.bf16 %v820, %v820
    %v857 = vpack.c.bf16 %v821, %v821
    %v858 = vpack.c.bf16 %v822, %v822
    %v859 = vpack.c.bf16 %v823, %v823
    %v860 = vpack.c.bf16 %v824, %v824
    %v861 = vpack.c.bf16 %v825, %v825
    %862 = vst [vmem:[%s4] sm:$0xf] %v826
    %863 = vst [vmem:[%s4 + $0x4] sm:$0xf] %v827
    %864 = vst [vmem:[%s4 + $0x8] sm:$0xf] %v828
    %865 = vst [vmem:[%s4 + $0xc] sm:$0xf] %v829
    %866 = vst [vmem:[%s4 + $0x10] sm:$0xf] %v830
    %867 = vst [vmem:[%s4 + $0x14] sm:$0xf] %v831
    %868 = vst [vmem:[%s4 + $0x18] sm:$0xf] %v832
    %869 = vst [vmem:[%s4 + $0x1c] sm:$0xf] %v833
    %870 = vst [vmem:[%s4 + $0x20] sm:$0xf] %v834
    %871 = vst [vmem:[%s4 + $0x24] sm:$0xf] %v835
    %872 = vst [vmem:[%s4 + $0x28] sm:$0xf] %v836
    %873 = vst [vmem:[%s4 + $0x2c] sm:$0xf] %v837
    %874 = vst [vmem:[%s4 + $0x30] sm:$0xf] %v838
    %875 = vst [vmem:[%s4 + $0x34] sm:$0xf] %v839
    %876 = vst [vmem:[%s4 + $0x38] sm:$0xf] %v840
    %877 = vst [vmem:[%s4 + $0x3c] sm:$0xf] %v841
    %878 = vst [vmem:[%s4 + $0x40] sm:$0xf] %v842
    %879 = vst [vmem:[%s4 + $0x44] sm:$0xf] %v843
    %880 = vst [vmem:[%s4 + $0x48] sm:$0xf] %v844
    %881 = vst [vmem:[%s4 + $0x4c] sm:$0xf] %v845
    %882 = vst [vmem:[%s4 + $0x50] sm:$0xf] %v846
    %883 = vst [vmem:[%s4 + $0x54] sm:$0xf] %v847
    %884 = vst [vmem:[%s4 + $0x58] sm:$0xf] %v848
    %885 = vst [vmem:[%s4 + $0x5c] sm:$0xf] %v849
    %886 = vst [vmem:[%s4 + $0x60] sm:$0xf] %v850
    %887 = vst [vmem:[%s4 + $0x64] sm:$0xf] %v851
    %888 = vst [vmem:[%s4 + $0x68] sm:$0xf] %v852
    %889 = vst [vmem:[%s4 + $0x6c] sm:$0xf] %v853
    %890 = vst [vmem:[%s4 + $0x70] sm:$0xf] %v854
    %891 = vst [vmem:[%s4 + $0x74] sm:$0xf] %v855
    %892 = vst [vmem:[%s4 + $0x78] sm:$0xf] %v856
    %893 = vst [vmem:[%s4 + $0x7c] sm:$0xf] %v857
    %894 = vst [vmem:[%s4 + $0x80] sm:$0xf] %v858
    %895 = vst [vmem:[%s4 + $0x84] sm:$0xf] %v859
    %896 = vst [vmem:[%s4 + $0x88] sm:$0xf] %v860
    %897 = vst [vmem:[%s4 + $0x8c] sm:$0xf] %v861
    %v898 = vadd.f32 %v790, %v791
    %v899 = vadd.f32 %v898, %v792
    %v900 = vadd.f32 %v899, %v793
    %v901 = vadd.f32 %v900, %v794
    %v902 = vadd.f32 %v901, %v795
    %v903 = vadd.f32 %v902, %v796
    %v904 = vadd.f32 %v903, %v797
    %v905 = vadd.f32 %v904, %v798
    %v906 = vadd.f32 %v905, %v799
    %v907 = vadd.f32 %v906, %v800
    %v908 = vadd.f32 %v907, %v801
    %v909 = vadd.f32 %v908, %v802
    %v910 = vadd.f32 %v909, %v803
    %v911 = vadd.f32 %v910, %v804
    %v912 = vadd.f32 %v911, %v805
    %v913 = vadd.f32 %v912, %v806
    %v914 = vadd.f32 %v913, %v807
    %v915 = vadd.f32 %v914, %v808
    %v916 = vadd.f32 %v915, %v809
    %v917 = vadd.f32 %v916, %v810
    %v918 = vadd.f32 %v917, %v811
    %v919 = vadd.f32 %v918, %v812
    %v920 = vadd.f32 %v919, %v813
    %v921 = vadd.f32 %v920, %v814
    %v922 = vadd.f32 %v921, %v815
    %v923 = vadd.f32 %v922, %v816
    %v924 = vadd.f32 %v923, %v817
    %v925 = vadd.f32 %v924, %v818
    %v926 = vadd.f32 %v925, %v819
    %v927 = vadd.f32 %v926, %v820
    %v928 = vadd.f32 %v927, %v821
    %v929 = vadd.f32 %v928, %v822
    %v930 = vadd.f32 %v929, %v823
    %v931 = vadd.f32 %v930, %v824
    %v932 = vadd.f32 %v931, %v825
    %v933 = vrot.slane %v932, 4
    %v934 = vadd.f32 %v932, %v933
    %v935 = vrot.slane %v934, 2
    %v936 = vadd.f32 %v934, %v935
    %v937 = vrot.slane %v936, 1
    %v938 = vadd.f32 %v936, %v937
    %v939 = vmul.f32 %v790, %v790
    %v940 = vmul.f32 %v791, %v791
    %v941 = vmul.f32 %v792, %v792
    %v942 = vmul.f32 %v793, %v793
    %v943 = vmul.f32 %v794, %v794
    %v944 = vmul.f32 %v795, %v795
    %v945 = vmul.f32 %v796, %v796
    %v946 = vmul.f32 %v797, %v797
    %v947 = vmul.f32 %v798, %v798
    %v948 = vmul.f32 %v799, %v799
    %v949 = vmul.f32 %v800, %v800
    %v950 = vmul.f32 %v801, %v801
    %v951 = vmul.f32 %v802, %v802
    %v952 = vmul.f32 %v803, %v803
    %v953 = vmul.f32 %v804, %v804
    %v954 = vmul.f32 %v805, %v805
    %v955 = vmul.f32 %v806, %v806
    %v956 = vmul.f32 %v807, %v807
    %v957 = vmul.f32 %v808, %v808
    %v958 = vmul.f32 %v809, %v809
    %v959 = vmul.f32 %v810, %v810
    %v960 = vmul.f32 %v811, %v811
    %v961 = vmul.f32 %v812, %v812
    %v962 = vmul.f32 %v813, %v813
    %v963 = vmul.f32 %v814, %v814
    %v964 = vmul.f32 %v815, %v815
    %v965 = vmul.f32 %v816, %v816
    %v966 = vmul.f32 %v817, %v817
    %v967 = vmul.f32 %v818, %v818
    %v968 = vmul.f32 %v819, %v819
    %v969 = vmul.f32 %v820, %v820
    %v970 = vmul.f32 %v821, %v821
    %v971 = vmul.f32 %v822, %v822
    %v972 = vmul.f32 %v823, %v823
    %v973 = vmul.f32 %v824, %v824
    %v974 = vmul.f32 %v825, %v825
    %v975 = vadd.f32 %v939, %v940
    %v976 = vadd.f32 %v975, %v941
    %v977 = vadd.f32 %v976, %v942
    %v978 = vadd.f32 %v977, %v943
    %v979 = vadd.f32 %v978, %v944
    %v980 = vadd.f32 %v979, %v945
    %v981 = vadd.f32 %v980, %v946
    %v982 = vadd.f32 %v981, %v947
    %v983 = vadd.f32 %v982, %v948
    %v984 = vadd.f32 %v983, %v949
    %v985 = vadd.f32 %v984, %v950
    %v986 = vadd.f32 %v985, %v951
    %v987 = vadd.f32 %v986, %v952
    %v988 = vadd.f32 %v987, %v953
    %v989 = vadd.f32 %v988, %v954
    %v990 = vadd.f32 %v989, %v955
    %v991 = vadd.f32 %v990, %v956
    %v992 = vadd.f32 %v991, %v957
    %v993 = vadd.f32 %v992, %v958
    %v994 = vadd.f32 %v993, %v959
    %v995 = vadd.f32 %v994, %v960
    %v996 = vadd.f32 %v995, %v961
    %v997 = vadd.f32 %v996, %v962
    %v998 = vadd.f32 %v997, %v963
    %v999 = vadd.f32 %v998, %v964
    %v1000 = vadd.f32 %v999, %v965
    %v1001 = vadd.f32 %v1000, %v966
    %v1002 = vadd.f32 %v1001, %v967
    %v1003 = vadd.f32 %v1002, %v968
    %v1004 = vadd.f32 %v1003, %v969
    %v1005 = vadd.f32 %v1004, %v970
    %v1006 = vadd.f32 %v1005, %v971
    %v1007 = vadd.f32 %v1006, %v972
    %v1008 = vadd.f32 %v1007, %v973
    %v1009 = vadd.f32 %v1008, %v974
    %v1010 = vrot.slane %v1009, 4
    %v1011 = vadd.f32 %v1009, %v1010
    %v1012 = vrot.slane %v1011, 2
    %v1013 = vadd.f32 %v1011, %v1012
    %v1014 = vrot.slane %v1013, 1
    %v1015 = vadd.f32 %v1013, %v1014
    %vm1016 = vcmask 1040384
    %v1017 = vsel %vm1016, %v938, %v1015
    %1018 = vst [vmem:[%s5] sm:$0x3] %v1017
  $region25: #{unet_conv2_forward.4} parent=0 // pred_fallthru
    _
  // Predicated region
  $region26: #{unet_conv2_forward.4} parent=0 // pred_check
    _
  $region27: #{unet_conv2_forward.4} parent=0 // pred_check_branch
    %1020 = sbr.rel (0) target = $region29
  $region28: #{unet_conv2_forward.4} parent=0 // pred_region
    _
  $region29: #{unet_conv2_forward.4} parent=0 // pred_fallthru
    _
  // Predicated region
  $region30: #{unet_conv2_forward.4} parent=0 // pred_check
    _
  $region31: #{unet_conv2_forward.4} parent=0 // pred_check_branch
    %1022 = sbr.rel (0) target = $region33
  $region32: #{unet_conv2_forward.4} parent=0 // pred_region
    _
  $region33: #{unet_conv2_forward.4} parent=0 // pred_fallthru
    _
  // Predicated region
  $region34: #{unet_conv2_forward.4} parent=0 // pred_check
    _
  $region35: #{unet_conv2_forward.4} parent=0 // pred_check_branch
    %1024 = sbr.rel (0) target = $region37
  $region36: #{unet_conv2_forward.4} parent=0 // pred_region
    _
  $region37: #{unet_conv2_forward.4} parent=0 // pred_fallthru
    _
  // Predicated region
  $region38: #{unet_conv2_forward.4} parent=0 // pred_check
    _
  $region39: #{unet_conv2_forward.4} parent=0 // pred_check_branch
    %1026 = sbr.rel (0) target = $region41
  $region40: #{unet_conv2_forward.4} parent=0 // pred_region
    _
  $region41: #{unet_conv2_forward.4} parent=0 // pred_fallthru
    _

</llo_original>
